<compile_context>
chip_gen: v7x
topology: tpu7x:2x2x1
jax: 0.10.0
libtpu: 0.0.40
codegen_flags: <defaults>
</compile_context>

<pallas_src>
import math

import numpy as np
import jax
import jax.numpy as jnp
from jax.experimental import pallas as pl
from jax.experimental.pallas import tpu as pltpu

_EPS = 1e-5  # nn.BatchNorm2d default


def _build_kernel(N, layer_dims, C, Wf):
    """layer_dims: list of 4 (H, W, Lin, Lout); Lin is the (possibly strided) input lane width."""
    f32, bf16 = jnp.float32, jnp.bfloat16

    def kernel(x_ref, w0_ref, w1_ref, w2_ref, w3_ref, bn_ref, dn_ref, up_ref, out_ref):
        w_refs = (w0_ref, w1_ref, w2_ref, w3_ref)

        # Activation layout: (N*H, lanes); conv outputs are dense (lane = w*C + c), pooled
        # activations are lane-strided (valid data at even-w groups, killed by zero band rows).
        x = x_ref[...].astype(f32)
        for l, (H, W, Lin, Lout) in enumerate(layer_dims):
            NH = N * H

            # ---- Conv3x3(pad=1): ONE bf16 matmul with K = 3*Lin -----------------------------
            # kh=0/2 taps = row-shifted views (static roll == static slices + concat); per-image
            # boundary rows zeroed by an iota mask.  W zero-padding is folded into the band.
            xb = x.astype(bf16)
            hrow = jax.lax.broadcasted_iota(jnp.int32, (NH, Lin), 0) % H
            zero = jnp.zeros_like(xb)
            t0 = jnp.where(hrow == 0, zero, jnp.roll(xb, 1, axis=0))       # reads row h-1
            t2 = jnp.where(hrow == H - 1, zero, jnp.roll(xb, -1, axis=0))  # reads row h+1
            xcat = jnp.concatenate([t0, xb, t2], axis=1)                   # (NH, 3*Lin)
            acc = jnp.dot(xcat, w_refs[l][...],
                          preferred_element_type=f32)                      # (NH, W*C) f32

            # ---- BatchNorm2d, training-mode batch stats (biased var, eps=1e-5) --------------
            # Conv bias omitted: exactly cancelled by the mean subtraction in train mode.
            inv_cnt = 1.0 / float(NH * W)
            ssum = jnp.sum(acc, axis=0, keepdims=True)
            ssq = jnp.sum(acc * acc, axis=0, keepdims=True)
            stats = jnp.dot(jnp.concatenate([ssum, ssq], axis=0), dn_ref[0:Lout, :],
                            preferred_element_type=f32) * inv_cnt          # (2, C)
            mean, ex2 = stats[0:1, :], stats[1:2, :]
            var = jnp.maximum(ex2 - mean * mean, 0.0)
            bnl = bn_ref[l]                                                # (2, C) gamma/beta
            scale = bnl[0:1, :] * jax.lax.rsqrt(var + _EPS)
            shift = bnl[1:2, :] - mean * scale
            aff = jnp.dot(jnp.concatenate([scale, shift], axis=0), up_ref[:, 0:Lout],
                          preferred_element_type=f32)                      # (2, W*C)

            # BN affine + ReLU: one FMA + one max over the lane-fused tile.
            y = jnp.maximum(acc * aff[0:1, :] + aff[1:2, :], 0.0)

            # ---- MaxPool2d(2) ----------------------------------------------------------------
            # W: lane roll + max; result stays lane-strided and feeds the next band as-is.
            y = jnp.maximum(y, jnp.roll(y, -C, axis=1))
            # H: row roll + max, then compact even rows with a tiny 0/1 selector matmul.
            y = jnp.maximum(y, jnp.roll(y, -1, axis=0))
            NHo = NH // 2
            ri = jax.lax.broadcasted_iota(jnp.int32, (NHo, NH), 0)
            ci = jax.lax.broadcasted_iota(jnp.int32, (NHo, NH), 1)
            psel = (ci == 2 * ri).astype(f32)
            x = jnp.dot(psel, y, preferred_element_type=f32)               # (NH//2, W*C)

        # Final: x is (N*Hf, 2*Wf*C) with valid data at even-w lane groups.
        if Wf == 1:
            out = x[:, 0:C]
        else:
            L3 = layer_dims[-1][3]
            rr = jax.lax.broadcasted_iota(jnp.int32, (L3, Wf * C), 0)
            cc = jax.lax.broadcasted_iota(jnp.int32, (L3, Wf * C), 1)
            gsel = (rr == cc + (cc // C) * C).astype(f32)
            out = jnp.dot(x, gsel, preferred_element_type=f32)
        out_ref[...] = out.astype(out_ref.dtype)

    return kernel


def _band_weights(w_oihw, W, in_stride):
    """PyTorch-layout weight (Cout, Cin, 3, 3) -> kh-stacked banded matmul weight (bf16).

    Output shape (3*Lin, W*Cout), Lin = W*in_stride.  Input lane layout: spatial wi, channel ci
    at lane wi*in_stride + ci (lanes ci >= Cin inside a stride group are the odd-w junk of the
    previous W-pool and get zero rows).  Out-of-range kw taps (W zero padding) are simply
    absent, so no padded input ever exists in W.
    """
    w_np = np.asarray(w_oihw, dtype=np.float32)
    Cout, Cin, KH, KW = w_np.shape
    Lin, Lout = W * in_stride, W * Cout
    band = np.zeros((KH * Lin, Lout), np.float32)
    for kh in range(KH):
        for kw in range(KW):
            tap = w_np[:, :, kh, kw].T                                     # (Cin, Cout)
            for wo in range(W):
                wi = wo + kw - 1
                if 0 <= wi < W:
                    r0 = kh * Lin + wi * in_stride
                    band[r0:r0 + Cin, wo * Cout:(wo + 1) * Cout] = tap
    return jnp.asarray(band, jnp.bfloat16)


def init_params(key, inchannel, outchannel, image_size):
    """Deterministic init matching nn.Conv2d / nn.BatchNorm2d defaults.
    Conv bias is omitted: train-mode BatchNorm's mean subtraction cancels it exactly."""
    assert image_size % 16 == 0, "kernel assumes even spatial dims at every pooling stage"
    raws, bands = [], []
    cin, W, stride = inchannel, image_size, inchannel
    for _ in range(4):
        key, k1 = jax.random.split(key)
        bound = 1.0 / math.sqrt(cin * 3 * 3)
        w_oihw = jax.random.uniform(k1, (outchannel, cin, 3, 3), jnp.float32,
                                    minval=-bound, maxval=bound)
        raws.append(w_oihw)
        bands.append(_band_weights(w_oihw, W, stride))
        cin, W, stride = outchannel, W // 2, 2 * outchannel
    gamma = jnp.ones((4, 1, outchannel), jnp.float32)   # BN weight default
    beta = jnp.zeros((4, 1, outchannel), jnp.float32)   # BN bias default
    bn = jnp.concatenate([gamma, beta], axis=1)         # (4, 2, C) stacked BN params
    return dict(bands=bands, bn=bn, w_oihw=raws)


def convnet4_forward(x_nchw, params, outchannel):
    N, Cin, H0, W0 = x_nchw.shape
    assert H0 % 16 == 0 and W0 % 16 == 0, "kernel assumes even spatial dims at every stage"
    C = outchannel
    Hf, Wf = H0 // 16, W0 // 16

    layer_dims = []
    H, W, stride = H0, W0, Cin
    for _ in range(4):
        layer_dims.append((H, W, W * stride, W * C))
        H, W, stride = H // 2, W // 2, 2 * C

    # NCHW (PyTorch) -> NHWC -> lane-fused (N*H, W*Cin) slab consumed by the kernel.
    x2d = jnp.transpose(x_nchw, (0, 2, 3, 1)).reshape(N * H0, W0 * Cin)

    # Tiny 0/1 selectors for the BN lane<->channel fold, passed as VMEM inputs so they are not
    # rebuilt/held live across the whole unrolled layer loop.
    Lmax = layer_dims[0][3]                              # widest conv-output lane extent = W0*C
    eye = np.eye(C, dtype=np.float32)
    sel_dn = jnp.asarray(np.tile(eye, (Lmax // C, 1)))   # (Lmax, C)
    sel_up = jnp.asarray(np.tile(eye, (1, Lmax // C)))   # (C, Lmax)

    args = (x2d, params["bands"][0], params["bands"][1], params["bands"][2],
            params["bands"][3], params["bn"], sel_dn, sel_up)

    arg_bytes = sum(int(np.prod(a.shape)) * a.dtype.itemsize for a in args)
    vmem_limit = int(min(64 * 1024 * 1024, max(16 * 1024 * 1024, 8 * arg_bytes)))

    vmem = pl.BlockSpec(memory_space=pltpu.MemorySpace.VMEM)
    out = pl.pallas_call(
        _build_kernel(N, layer_dims, C, Wf),
        out_shape=jax.ShapeDtypeStruct((N * Hf, Wf * C), x_nchw.dtype),
        in_specs=[vmem] * len(args),
        out_specs=vmem,
        compiler_params=pltpu.CompilerParams(vmem_limit_bytes=vmem_limit),
    )(*args)

    # Back to PyTorch's NCHW flatten order: x.view(-1, C*Hf*Wf).
    out = out.reshape(N, Hf, Wf, C).transpose(0, 3, 1, 2)
    return out.reshape(N, -1)


def _reference_forward(x_nchw, params, outchannel):
    """Plain-JAX reference of the PyTorch module (train-mode BN), for a sanity cross-check."""
    gamma = params["bn"][:, 0, :]
    beta = params["bn"][:, 1, :]
    y = x_nchw
    for l in range(4):
        y = jax.lax.conv_general_dilated(
            y, params["w_oihw"][l], window_strides=(1, 1), padding="SAME",
            dimension_numbers=("NCHW", "OIHW", "NCHW"))
        mean = jnp.mean(y, axis=(0, 2, 3), keepdims=True)
        var = jnp.mean(jnp.square(y - mean), axis=(0, 2, 3), keepdims=True)  # biased (train mode)
        y = (y - mean) * jax.lax.rsqrt(var + _EPS)
        y = y * gamma[l].reshape(1, -1, 1, 1) + beta[l].reshape(1, -1, 1, 1)
        y = jnp.maximum(y, 0.0)
        y = jax.lax.reduce_window(y, -jnp.inf, jax.lax.max,
                                  (1, 1, 2, 2), (1, 1, 2, 2), "VALID")
    return y.reshape(y.shape[0], -1)


if __name__ == "__main__":
    inchannel, outchannel, image_size, batch = 4, 8, 16, 2
    final = image_size // 16
    outdim = final * final * outchannel

    key = jax.random.PRNGKey(0)
    kx, kp = jax.random.split(key)
    x = jax.random.normal(kx, (batch, inchannel, image_size, image_size), jnp.float32)
    params = init_params(kp, inchannel, outchannel, image_size)

    out = jax.block_until_ready(convnet4_forward(x, params, outchannel))
    assert out.shape == (batch, outdim), out.shape
    assert bool(jnp.all(jnp.isfinite(out)))

    # Sanity cross-check vs. plain JAX (loose tolerance: the kernel uses bf16 conv operands).
    ref = jax.block_until_ready(_reference_forward(x, params, outchannel))
    rel = float(jnp.linalg.norm(out - ref) / (jnp.linalg.norm(ref) + 1e-6))
    assert rel < 8e-2, rel

    print("KERNEL_OK")
</pallas_src>

<mosaic_0001>
module attributes {stable_mosaic.version = 11 : i64} {
  func.func @kernel(%arg0: memref<32x64xf32, #tpu.memory_space<vmem>>, %arg1: memref<192x128xbf16, #tpu.memory_space<vmem>>, %arg2: memref<384x64xbf16, #tpu.memory_space<vmem>>, %arg3: memref<192x32xbf16, #tpu.memory_space<vmem>>, %arg4: memref<96x16xbf16, #tpu.memory_space<vmem>>, %arg5: memref<4x2x8xf32, #tpu.memory_space<vmem>>, %arg6: memref<128x8xf32, #tpu.memory_space<vmem>>, %arg7: memref<8x128xf32, #tpu.memory_space<vmem>>, %arg8: memref<2x8xf32, #tpu.memory_space<vmem>>) attributes {dimension_semantics = [], scalar_prefetch = 0 : i64, scratch_operands = 0 : i64, tpu.core_type = #tpu.core_type<tc>} {
    %c0 = arith.constant 0 : index
    %c0_0 = arith.constant 0 : index
    %0 = vector.load %arg0[%c0, %c0_0] : memref<32x64xf32, #tpu.memory_space<vmem>>, vector<32x64xf32>
    %1 = arith.truncf %0 : vector<32x64xf32> to vector<32x64xbf16>
    %2 = tpu.iota {dimensions = array<i32: 0>} : vector<32x64xi32>
    %c16_i32 = arith.constant 16 : i32
    %c0_i32 = arith.constant 0 : i32
    %3 = arith.cmpi eq, %c16_i32, %c0_i32 : i32
    %c1_i32 = arith.constant 1 : i32
    %4 = arith.select %3, %c1_i32, %c16_i32 : i32
    %5 = vector.broadcast %4 : i32 to vector<32x64xi32>
    %6 = arith.remsi %2, %5 : vector<32x64xi32>
    %c0_i32_1 = arith.constant 0 : i32
    %7 = vector.broadcast %c0_i32_1 : i32 to vector<32x64xi32>
    %8 = arith.cmpi ne, %6, %7 : vector<32x64xi32>
    %c0_i32_2 = arith.constant 0 : i32
    %9 = vector.broadcast %c0_i32_2 : i32 to vector<32x64xi32>
    %10 = arith.cmpi slt, %6, %9 : vector<32x64xi32>
    %c0_i32_3 = arith.constant 0 : i32
    %11 = arith.cmpi slt, %4, %c0_i32_3 : i32
    %12 = vector.broadcast %11 : i1 to vector<32x64xi1>
    %13 = vector.broadcast %12 : vector<32x64xi1> to vector<32x64xi1>
    %14 = arith.xori %10, %13 : vector<32x64xi1>
    %15 = arith.andi %14, %8 : vector<32x64xi1>
    %16 = vector.broadcast %4 : i32 to vector<32x64xi32>
    %17 = arith.addi %6, %16 : vector<32x64xi32>
    %18 = arith.select %15, %17, %6 : vector<32x64xi1>, vector<32x64xi32>
    %cst = arith.constant 0.000000e+00 : bf16
    %19 = vector.broadcast %cst : bf16 to vector<32x64xbf16>
    %c0_i32_4 = arith.constant 0 : i32
    %20 = vector.broadcast %c0_i32_4 : i32 to vector<32x64xi32>
    %21 = arith.cmpi eq, %18, %20 : vector<32x64xi32>
    %22 = vector.extract_strided_slice %1 {offsets = [31, 0], sizes = [1, 64], strides = [1, 1]} : vector<32x64xbf16> to vector<1x64xbf16>
    %23 = vector.extract_strided_slice %1 {offsets = [0, 0], sizes = [31, 64], strides = [1, 1]} : vector<32x64xbf16> to vector<31x64xbf16>
    %24 = tpu.concatenate %22, %23 in 0 : vector<1x64xbf16>, vector<31x64xbf16> -> vector<32x64xbf16>
    %25 = arith.select %21, %19, %24 : vector<32x64xi1>, vector<32x64xbf16>
    %c15_i32 = arith.constant 15 : i32
    %26 = vector.broadcast %c15_i32 : i32 to vector<32x64xi32>
    %27 = arith.cmpi eq, %18, %26 : vector<32x64xi32>
    %28 = vector.extract_strided_slice %1 {offsets = [1, 0], sizes = [31, 64], strides = [1, 1]} : vector<32x64xbf16> to vector<31x64xbf16>
    %29 = vector.extract_strided_slice %1 {offsets = [0, 0], sizes = [1, 64], strides = [1, 1]} : vector<32x64xbf16> to vector<1x64xbf16>
    %30 = tpu.concatenate %28, %29 in 0 : vector<31x64xbf16>, vector<1x64xbf16> -> vector<32x64xbf16>
    %31 = arith.select %27, %19, %30 : vector<32x64xi1>, vector<32x64xbf16>
    %32 = tpu.concatenate %25, %1, %31 in 1 : vector<32x64xbf16>, vector<32x64xbf16>, vector<32x64xbf16> -> vector<32x192xbf16>
    %c0_5 = arith.constant 0 : index
    %c0_6 = arith.constant 0 : index
    %33 = vector.load %arg1[%c0_5, %c0_6] : memref<192x128xbf16, #tpu.memory_space<vmem>>, vector<192x128xbf16>
    %cst_7 = arith.constant dense<0.000000e+00> : vector<32x128xf32>
    %34 = tpu.matmul %32, %33, %cst_7 {dimension_numbers = #tpu.dot_dimension_numbers<[1], [0], [0], [1], [0, 0, 1, 1], [], []>} : vector<32x192xbf16>, vector<192x128xbf16>, vector<32x128xf32> -> vector<32x128xf32>
    %cst_8 = arith.constant dense<0.000000e+00> : vector<128xf32>
    %35 = vector.multi_reduction <add>, %34, %cst_8 [0] : vector<32x128xf32> to vector<128xf32>
    %36 = vector.shape_cast %35 : vector<128xf32> to vector<1x128xf32>
    %37 = arith.mulf %34, %34 : vector<32x128xf32>
    %cst_9 = arith.constant dense<0.000000e+00> : vector<128xf32>
    %38 = vector.multi_reduction <add>, %37, %cst_9 [0] : vector<32x128xf32> to vector<128xf32>
    %39 = vector.shape_cast %38 : vector<128xf32> to vector<1x128xf32>
    %40 = tpu.concatenate %36, %39 in 0 : vector<1x128xf32>, vector<1x128xf32> -> vector<2x128xf32>
    %c0_10 = arith.constant 0 : index
    %c0_11 = arith.constant 0 : index
    %41 = vector.load %arg6[%c0_10, %c0_11] : memref<128x8xf32, #tpu.memory_space<vmem>>, vector<128x8xf32>
    %cst_12 = arith.constant dense<0.000000e+00> : vector<2x8xf32>
    %42 = tpu.matmul %40, %41, %cst_12 {dimension_numbers = #tpu.dot_dimension_numbers<[1], [0], [0], [1], [0, 0, 1, 1], [], []>} : vector<2x128xf32>, vector<128x8xf32>, vector<2x8xf32> -> vector<2x8xf32>
    %cst_13 = arith.constant 0.001953125 : f32
    %43 = vector.broadcast %cst_13 : f32 to vector<2x8xf32>
    %44 = arith.mulf %42, %43 : vector<2x8xf32>
    %45 = vector.extract_strided_slice %44 {offsets = [0, 0], sizes = [1, 8], strides = [1, 1]} : vector<2x8xf32> to vector<1x8xf32>
    %46 = vector.extract_strided_slice %44 {offsets = [1, 0], sizes = [1, 8], strides = [1, 1]} : vector<2x8xf32> to vector<1x8xf32>
    %47 = arith.mulf %45, %45 : vector<1x8xf32>
    %48 = arith.subf %46, %47 : vector<1x8xf32>
    %cst_14 = arith.constant 0.000000e+00 : f32
    %49 = vector.broadcast %cst_14 : f32 to vector<1x8xf32>
    %50 = arith.maximumf %48, %49 : vector<1x8xf32>
    %c0_15 = arith.constant 0 : index
    %c0_16 = arith.constant 0 : index
    %c0_17 = arith.constant 0 : index
    %51 = vector.load %arg5[%c0_15, %c0_16, %c0_17] : memref<4x2x8xf32, #tpu.memory_space<vmem>>, vector<1x2x8xf32>
    %52 = vector.shape_cast %51 : vector<1x2x8xf32> to vector<2x8xf32>
    %53 = vector.extract_strided_slice %52 {offsets = [0, 0], sizes = [1, 8], strides = [1, 1]} : vector<2x8xf32> to vector<1x8xf32>
    %cst_18 = arith.constant 9.99999974E-6 : f32
    %54 = vector.broadcast %cst_18 : f32 to vector<1x8xf32>
    %55 = arith.addf %50, %54 : vector<1x8xf32>
    %56 = math.rsqrt %55 : vector<1x8xf32>
    %57 = arith.mulf %53, %56 : vector<1x8xf32>
    %58 = vector.extract_strided_slice %52 {offsets = [1, 0], sizes = [1, 8], strides = [1, 1]} : vector<2x8xf32> to vector<1x8xf32>
    %59 = arith.mulf %45, %57 : vector<1x8xf32>
    %60 = arith.subf %58, %59 : vector<1x8xf32>
    %61 = tpu.concatenate %57, %60 in 0 : vector<1x8xf32>, vector<1x8xf32> -> vector<2x8xf32>
    %c0_19 = arith.constant 0 : index
    %c0_20 = arith.constant 0 : index
    %62 = vector.load %arg7[%c0_19, %c0_20] : memref<8x128xf32, #tpu.memory_space<vmem>>, vector<8x128xf32>
    %cst_21 = arith.constant dense<0.000000e+00> : vector<2x128xf32>
    %63 = tpu.matmul %61, %62, %cst_21 {dimension_numbers = #tpu.dot_dimension_numbers<[1], [0], [0], [1], [0, 0, 1, 1], [], []>} : vector<2x8xf32>, vector<8x128xf32>, vector<2x128xf32> -> vector<2x128xf32>
    %64 = vector.extract_strided_slice %63 {offsets = [0, 0], sizes = [1, 128], strides = [1, 1]} : vector<2x128xf32> to vector<1x128xf32>
    %65 = vector.broadcast %64 : vector<1x128xf32> to vector<32x128xf32>
    %66 = arith.mulf %34, %65 : vector<32x128xf32>
    %67 = vector.extract_strided_slice %63 {offsets = [1, 0], sizes = [1, 128], strides = [1, 1]} : vector<2x128xf32> to vector<1x128xf32>
    %68 = vector.broadcast %67 : vector<1x128xf32> to vector<32x128xf32>
    %69 = arith.addf %66, %68 : vector<32x128xf32>
    %cst_22 = arith.constant 0.000000e+00 : f32
    %70 = vector.broadcast %cst_22 : f32 to vector<32x128xf32>
    %71 = arith.maximumf %69, %70 : vector<32x128xf32>
    %72 = vector.extract_strided_slice %71 {offsets = [0, 8], sizes = [32, 120], strides = [1, 1]} : vector<32x128xf32> to vector<32x120xf32>
    %73 = vector.extract_strided_slice %71 {offsets = [0, 0], sizes = [32, 8], strides = [1, 1]} : vector<32x128xf32> to vector<32x8xf32>
    %74 = tpu.concatenate %72, %73 in 1 : vector<32x120xf32>, vector<32x8xf32> -> vector<32x128xf32>
    %75 = arith.maximumf %71, %74 : vector<32x128xf32>
    %76 = vector.extract_strided_slice %75 {offsets = [1, 0], sizes = [31, 128], strides = [1, 1]} : vector<32x128xf32> to vector<31x128xf32>
    %77 = vector.extract_strided_slice %75 {offsets = [0, 0], sizes = [1, 128], strides = [1, 1]} : vector<32x128xf32> to vector<1x128xf32>
    %78 = tpu.concatenate %76, %77 in 0 : vector<31x128xf32>, vector<1x128xf32> -> vector<32x128xf32>
    %79 = arith.maximumf %75, %78 : vector<32x128xf32>
    %80 = tpu.iota {dimensions = array<i32: 0>} : vector<16x32xi32>
    %81 = tpu.iota {dimensions = array<i32: 1>} : vector<16x32xi32>
    %c2_i32 = arith.constant 2 : i32
    %82 = vector.broadcast %c2_i32 : i32 to vector<16x32xi32>
    %83 = arith.muli %82, %80 : vector<16x32xi32>
    %84 = arith.cmpi eq, %81, %83 : vector<16x32xi32>
    %85 = arith.extui %84 : vector<16x32xi1> to vector<16x32xi32>
    %86 = arith.sitofp %85 : vector<16x32xi32> to vector<16x32xf32>
    %cst_23 = arith.constant dense<0.000000e+00> : vector<16x128xf32>
    %87 = tpu.matmul %86, %79, %cst_23 {dimension_numbers = #tpu.dot_dimension_numbers<[1], [0], [0], [1], [0, 0, 1, 1], [], []>} : vector<16x32xf32>, vector<32x128xf32>, vector<16x128xf32> -> vector<16x128xf32>
    %88 = arith.truncf %87 : vector<16x128xf32> to vector<16x128xbf16>
    %89 = tpu.iota {dimensions = array<i32: 0>} : vector<16x128xi32>
    %c8_i32 = arith.constant 8 : i32
    %c0_i32_24 = arith.constant 0 : i32
    %90 = arith.cmpi eq, %c8_i32, %c0_i32_24 : i32
    %c1_i32_25 = arith.constant 1 : i32
    %91 = arith.select %90, %c1_i32_25, %c8_i32 : i32
    %92 = vector.broadcast %91 : i32 to vector<16x128xi32>
    %93 = arith.remsi %89, %92 : vector<16x128xi32>
    %c0_i32_26 = arith.constant 0 : i32
    %94 = vector.broadcast %c0_i32_26 : i32 to vector<16x128xi32>
    %95 = arith.cmpi ne, %93, %94 : vector<16x128xi32>
    %c0_i32_27 = arith.constant 0 : i32
    %96 = vector.broadcast %c0_i32_27 : i32 to vector<16x128xi32>
    %97 = arith.cmpi slt, %93, %96 : vector<16x128xi32>
    %c0_i32_28 = arith.constant 0 : i32
    %98 = arith.cmpi slt, %91, %c0_i32_28 : i32
    %99 = vector.broadcast %98 : i1 to vector<16x128xi1>
    %100 = vector.broadcast %99 : vector<16x128xi1> to vector<16x128xi1>
    %101 = arith.xori %97, %100 : vector<16x128xi1>
    %102 = arith.andi %101, %95 : vector<16x128xi1>
    %103 = vector.broadcast %91 : i32 to vector<16x128xi32>
    %104 = arith.addi %93, %103 : vector<16x128xi32>
    %105 = arith.select %102, %104, %93 : vector<16x128xi1>, vector<16x128xi32>
    %cst_29 = arith.constant 0.000000e+00 : bf16
    %106 = vector.broadcast %cst_29 : bf16 to vector<16x128xbf16>
    %c0_i32_30 = arith.constant 0 : i32
    %107 = vector.broadcast %c0_i32_30 : i32 to vector<16x128xi32>
    %108 = arith.cmpi eq, %105, %107 : vector<16x128xi32>
    %109 = vector.extract_strided_slice %88 {offsets = [15, 0], sizes = [1, 128], strides = [1, 1]} : vector<16x128xbf16> to vector<1x128xbf16>
    %110 = vector.extract_strided_slice %88 {offsets = [0, 0], sizes = [15, 128], strides = [1, 1]} : vector<16x128xbf16> to vector<15x128xbf16>
    %111 = tpu.concatenate %109, %110 in 0 : vector<1x128xbf16>, vector<15x128xbf16> -> vector<16x128xbf16>
    %112 = arith.select %108, %106, %111 : vector<16x128xi1>, vector<16x128xbf16>
    %c7_i32 = arith.constant 7 : i32
    %113 = vector.broadcast %c7_i32 : i32 to vector<16x128xi32>
    %114 = arith.cmpi eq, %105, %113 : vector<16x128xi32>
    %115 = vector.extract_strided_slice %88 {offsets = [1, 0], sizes = [15, 128], strides = [1, 1]} : vector<16x128xbf16> to vector<15x128xbf16>
    %116 = vector.extract_strided_slice %88 {offsets = [0, 0], sizes = [1, 128], strides = [1, 1]} : vector<16x128xbf16> to vector<1x128xbf16>
    %117 = tpu.concatenate %115, %116 in 0 : vector<15x128xbf16>, vector<1x128xbf16> -> vector<16x128xbf16>
    %118 = arith.select %114, %106, %117 : vector<16x128xi1>, vector<16x128xbf16>
    %119 = tpu.concatenate %112, %88, %118 in 1 : vector<16x128xbf16>, vector<16x128xbf16>, vector<16x128xbf16> -> vector<16x384xbf16>
    %c0_31 = arith.constant 0 : index
    %c0_32 = arith.constant 0 : index
    %120 = vector.load %arg2[%c0_31, %c0_32] : memref<384x64xbf16, #tpu.memory_space<vmem>>, vector<384x64xbf16>
    %cst_33 = arith.constant dense<0.000000e+00> : vector<16x64xf32>
    %121 = tpu.matmul %119, %120, %cst_33 {dimension_numbers = #tpu.dot_dimension_numbers<[1], [0], [0], [1], [0, 0, 1, 1], [], []>} : vector<16x384xbf16>, vector<384x64xbf16>, vector<16x64xf32> -> vector<16x64xf32>
    %cst_34 = arith.constant dense<0.000000e+00> : vector<64xf32>
    %122 = vector.multi_reduction <add>, %121, %cst_34 [0] : vector<16x64xf32> to vector<64xf32>
    %123 = vector.shape_cast %122 : vector<64xf32> to vector<1x64xf32>
    %124 = arith.mulf %121, %121 : vector<16x64xf32>
    %cst_35 = arith.constant dense<0.000000e+00> : vector<64xf32>
    %125 = vector.multi_reduction <add>, %124, %cst_35 [0] : vector<16x64xf32> to vector<64xf32>
    %126 = vector.shape_cast %125 : vector<64xf32> to vector<1x64xf32>
    %127 = tpu.concatenate %123, %126 in 0 : vector<1x64xf32>, vector<1x64xf32> -> vector<2x64xf32>
    %c0_36 = arith.constant 0 : index
    %c0_37 = arith.constant 0 : index
    %128 = vector.load %arg6[%c0_36, %c0_37] : memref<128x8xf32, #tpu.memory_space<vmem>>, vector<64x8xf32>
    %cst_38 = arith.constant dense<0.000000e+00> : vector<2x8xf32>
    %129 = tpu.matmul %127, %128, %cst_38 {dimension_numbers = #tpu.dot_dimension_numbers<[1], [0], [0], [1], [0, 0, 1, 1], [], []>} : vector<2x64xf32>, vector<64x8xf32>, vector<2x8xf32> -> vector<2x8xf32>
    %cst_39 = arith.constant 7.812500e-03 : f32
    %130 = vector.broadcast %cst_39 : f32 to vector<2x8xf32>
    %131 = arith.mulf %129, %130 : vector<2x8xf32>
    %132 = vector.extract_strided_slice %131 {offsets = [0, 0], sizes = [1, 8], strides = [1, 1]} : vector<2x8xf32> to vector<1x8xf32>
    %133 = vector.extract_strided_slice %131 {offsets = [1, 0], sizes = [1, 8], strides = [1, 1]} : vector<2x8xf32> to vector<1x8xf32>
    %134 = arith.mulf %132, %132 : vector<1x8xf32>
    %135 = arith.subf %133, %134 : vector<1x8xf32>
    %cst_40 = arith.constant 0.000000e+00 : f32
    %136 = vector.broadcast %cst_40 : f32 to vector<1x8xf32>
    %137 = arith.maximumf %135, %136 : vector<1x8xf32>
    %c1 = arith.constant 1 : index
    %c0_41 = arith.constant 0 : index
    %c0_42 = arith.constant 0 : index
    %138 = vector.load %arg5[%c1, %c0_41, %c0_42] : memref<4x2x8xf32, #tpu.memory_space<vmem>>, vector<1x2x8xf32>
    %139 = vector.shape_cast %138 : vector<1x2x8xf32> to vector<2x8xf32>
    %140 = vector.extract_strided_slice %139 {offsets = [0, 0], sizes = [1, 8], strides = [1, 1]} : vector<2x8xf32> to vector<1x8xf32>
    %cst_43 = arith.constant 9.99999974E-6 : f32
    %141 = vector.broadcast %cst_43 : f32 to vector<1x8xf32>
    %142 = arith.addf %137, %141 : vector<1x8xf32>
    %143 = math.rsqrt %142 : vector<1x8xf32>
    %144 = arith.mulf %140, %143 : vector<1x8xf32>
    %145 = vector.extract_strided_slice %139 {offsets = [1, 0], sizes = [1, 8], strides = [1, 1]} : vector<2x8xf32> to vector<1x8xf32>
    %146 = arith.mulf %132, %144 : vector<1x8xf32>
    %147 = arith.subf %145, %146 : vector<1x8xf32>
    %148 = tpu.concatenate %144, %147 in 0 : vector<1x8xf32>, vector<1x8xf32> -> vector<2x8xf32>
    %c0_44 = arith.constant 0 : index
    %c0_45 = arith.constant 0 : index
    %149 = vector.load %arg7[%c0_44, %c0_45] : memref<8x128xf32, #tpu.memory_space<vmem>>, vector<8x64xf32>
    %cst_46 = arith.constant dense<0.000000e+00> : vector<2x64xf32>
    %150 = tpu.matmul %148, %149, %cst_46 {dimension_numbers = #tpu.dot_dimension_numbers<[1], [0], [0], [1], [0, 0, 1, 1], [], []>} : vector<2x8xf32>, vector<8x64xf32>, vector<2x64xf32> -> vector<2x64xf32>
    %151 = vector.extract_strided_slice %150 {offsets = [0, 0], sizes = [1, 64], strides = [1, 1]} : vector<2x64xf32> to vector<1x64xf32>
    %152 = vector.broadcast %151 : vector<1x64xf32> to vector<16x64xf32>
    %153 = arith.mulf %121, %152 : vector<16x64xf32>
    %154 = vector.extract_strided_slice %150 {offsets = [1, 0], sizes = [1, 64], strides = [1, 1]} : vector<2x64xf32> to vector<1x64xf32>
    %155 = vector.broadcast %154 : vector<1x64xf32> to vector<16x64xf32>
    %156 = arith.addf %153, %155 : vector<16x64xf32>
    %cst_47 = arith.constant 0.000000e+00 : f32
    %157 = vector.broadcast %cst_47 : f32 to vector<16x64xf32>
    %158 = arith.maximumf %156, %157 : vector<16x64xf32>
    %159 = vector.extract_strided_slice %158 {offsets = [0, 8], sizes = [16, 56], strides = [1, 1]} : vector<16x64xf32> to vector<16x56xf32>
    %160 = vector.extract_strided_slice %158 {offsets = [0, 0], sizes = [16, 8], strides = [1, 1]} : vector<16x64xf32> to vector<16x8xf32>
    %161 = tpu.concatenate %159, %160 in 1 : vector<16x56xf32>, vector<16x8xf32> -> vector<16x64xf32>
    %162 = arith.maximumf %158, %161 : vector<16x64xf32>
    %163 = vector.extract_strided_slice %162 {offsets = [1, 0], sizes = [15, 64], strides = [1, 1]} : vector<16x64xf32> to vector<15x64xf32>
    %164 = vector.extract_strided_slice %162 {offsets = [0, 0], sizes = [1, 64], strides = [1, 1]} : vector<16x64xf32> to vector<1x64xf32>
    %165 = tpu.concatenate %163, %164 in 0 : vector<15x64xf32>, vector<1x64xf32> -> vector<16x64xf32>
    %166 = arith.maximumf %162, %165 : vector<16x64xf32>
    %167 = tpu.iota {dimensions = array<i32: 0>} : vector<8x16xi32>
    %168 = tpu.iota {dimensions = array<i32: 1>} : vector<8x16xi32>
    %c2_i32_48 = arith.constant 2 : i32
    %169 = vector.broadcast %c2_i32_48 : i32 to vector<8x16xi32>
    %170 = arith.muli %169, %167 : vector<8x16xi32>
    %171 = arith.cmpi eq, %168, %170 : vector<8x16xi32>
    %172 = arith.extui %171 : vector<8x16xi1> to vector<8x16xi32>
    %173 = arith.sitofp %172 : vector<8x16xi32> to vector<8x16xf32>
    %cst_49 = arith.constant dense<0.000000e+00> : vector<8x64xf32>
    %174 = tpu.matmul %173, %166, %cst_49 {dimension_numbers = #tpu.dot_dimension_numbers<[1], [0], [0], [1], [0, 0, 1, 1], [], []>} : vector<8x16xf32>, vector<16x64xf32>, vector<8x64xf32> -> vector<8x64xf32>
    %175 = arith.truncf %174 : vector<8x64xf32> to vector<8x64xbf16>
    %176 = tpu.iota {dimensions = array<i32: 0>} : vector<8x64xi32>
    %c4_i32 = arith.constant 4 : i32
    %c0_i32_50 = arith.constant 0 : i32
    %177 = arith.cmpi eq, %c4_i32, %c0_i32_50 : i32
    %c1_i32_51 = arith.constant 1 : i32
    %178 = arith.select %177, %c1_i32_51, %c4_i32 : i32
    %179 = vector.broadcast %178 : i32 to vector<8x64xi32>
    %180 = arith.remsi %176, %179 : vector<8x64xi32>
    %c0_i32_52 = arith.constant 0 : i32
    %181 = vector.broadcast %c0_i32_52 : i32 to vector<8x64xi32>
    %182 = arith.cmpi ne, %180, %181 : vector<8x64xi32>
    %c0_i32_53 = arith.constant 0 : i32
    %183 = vector.broadcast %c0_i32_53 : i32 to vector<8x64xi32>
    %184 = arith.cmpi slt, %180, %183 : vector<8x64xi32>
    %c0_i32_54 = arith.constant 0 : i32
    %185 = arith.cmpi slt, %178, %c0_i32_54 : i32
    %186 = vector.broadcast %185 : i1 to vector<8x64xi1>
    %187 = vector.broadcast %186 : vector<8x64xi1> to vector<8x64xi1>
    %188 = arith.xori %184, %187 : vector<8x64xi1>
    %189 = arith.andi %188, %182 : vector<8x64xi1>
    %190 = vector.broadcast %178 : i32 to vector<8x64xi32>
    %191 = arith.addi %180, %190 : vector<8x64xi32>
    %192 = arith.select %189, %191, %180 : vector<8x64xi1>, vector<8x64xi32>
    %cst_55 = arith.constant 0.000000e+00 : bf16
    %193 = vector.broadcast %cst_55 : bf16 to vector<8x64xbf16>
    %c0_i32_56 = arith.constant 0 : i32
    %194 = vector.broadcast %c0_i32_56 : i32 to vector<8x64xi32>
    %195 = arith.cmpi eq, %192, %194 : vector<8x64xi32>
    %196 = vector.extract_strided_slice %175 {offsets = [7, 0], sizes = [1, 64], strides = [1, 1]} : vector<8x64xbf16> to vector<1x64xbf16>
    %197 = vector.extract_strided_slice %175 {offsets = [0, 0], sizes = [7, 64], strides = [1, 1]} : vector<8x64xbf16> to vector<7x64xbf16>
    %198 = tpu.concatenate %196, %197 in 0 : vector<1x64xbf16>, vector<7x64xbf16> -> vector<8x64xbf16>
    %199 = arith.select %195, %193, %198 : vector<8x64xi1>, vector<8x64xbf16>
    %c3_i32 = arith.constant 3 : i32
    %200 = vector.broadcast %c3_i32 : i32 to vector<8x64xi32>
    %201 = arith.cmpi eq, %192, %200 : vector<8x64xi32>
    %202 = vector.extract_strided_slice %175 {offsets = [1, 0], sizes = [7, 64], strides = [1, 1]} : vector<8x64xbf16> to vector<7x64xbf16>
    %203 = vector.extract_strided_slice %175 {offsets = [0, 0], sizes = [1, 64], strides = [1, 1]} : vector<8x64xbf16> to vector<1x64xbf16>
    %204 = tpu.concatenate %202, %203 in 0 : vector<7x64xbf16>, vector<1x64xbf16> -> vector<8x64xbf16>
    %205 = arith.select %201, %193, %204 : vector<8x64xi1>, vector<8x64xbf16>
    %206 = tpu.concatenate %199, %175, %205 in 1 : vector<8x64xbf16>, vector<8x64xbf16>, vector<8x64xbf16> -> vector<8x192xbf16>
    %c0_57 = arith.constant 0 : index
    %c0_58 = arith.constant 0 : index
    %207 = vector.load %arg3[%c0_57, %c0_58] : memref<192x32xbf16, #tpu.memory_space<vmem>>, vector<192x32xbf16>
    %cst_59 = arith.constant dense<0.000000e+00> : vector<8x32xf32>
    %208 = tpu.matmul %206, %207, %cst_59 {dimension_numbers = #tpu.dot_dimension_numbers<[1], [0], [0], [1], [0, 0, 1, 1], [], []>} : vector<8x192xbf16>, vector<192x32xbf16>, vector<8x32xf32> -> vector<8x32xf32>
    %cst_60 = arith.constant dense<0.000000e+00> : vector<32xf32>
    %209 = vector.multi_reduction <add>, %208, %cst_60 [0] : vector<8x32xf32> to vector<32xf32>
    %210 = vector.shape_cast %209 : vector<32xf32> to vector<1x32xf32>
    %211 = arith.mulf %208, %208 : vector<8x32xf32>
    %cst_61 = arith.constant dense<0.000000e+00> : vector<32xf32>
    %212 = vector.multi_reduction <add>, %211, %cst_61 [0] : vector<8x32xf32> to vector<32xf32>
    %213 = vector.shape_cast %212 : vector<32xf32> to vector<1x32xf32>
    %214 = tpu.concatenate %210, %213 in 0 : vector<1x32xf32>, vector<1x32xf32> -> vector<2x32xf32>
    %c0_62 = arith.constant 0 : index
    %c0_63 = arith.constant 0 : index
    %215 = vector.load %arg6[%c0_62, %c0_63] : memref<128x8xf32, #tpu.memory_space<vmem>>, vector<32x8xf32>
    %cst_64 = arith.constant dense<0.000000e+00> : vector<2x8xf32>
    %216 = tpu.matmul %214, %215, %cst_64 {dimension_numbers = #tpu.dot_dimension_numbers<[1], [0], [0], [1], [0, 0, 1, 1], [], []>} : vector<2x32xf32>, vector<32x8xf32>, vector<2x8xf32> -> vector<2x8xf32>
    %cst_65 = arith.constant 3.125000e-02 : f32
    %217 = vector.broadcast %cst_65 : f32 to vector<2x8xf32>
    %218 = arith.mulf %216, %217 : vector<2x8xf32>
    %219 = vector.extract_strided_slice %218 {offsets = [0, 0], sizes = [1, 8], strides = [1, 1]} : vector<2x8xf32> to vector<1x8xf32>
    %220 = vector.extract_strided_slice %218 {offsets = [1, 0], sizes = [1, 8], strides = [1, 1]} : vector<2x8xf32> to vector<1x8xf32>
    %221 = arith.mulf %219, %219 : vector<1x8xf32>
    %222 = arith.subf %220, %221 : vector<1x8xf32>
    %cst_66 = arith.constant 0.000000e+00 : f32
    %223 = vector.broadcast %cst_66 : f32 to vector<1x8xf32>
    %224 = arith.maximumf %222, %223 : vector<1x8xf32>
    %c2 = arith.constant 2 : index
    %c0_67 = arith.constant 0 : index
    %c0_68 = arith.constant 0 : index
    %225 = vector.load %arg5[%c2, %c0_67, %c0_68] : memref<4x2x8xf32, #tpu.memory_space<vmem>>, vector<1x2x8xf32>
    %226 = vector.shape_cast %225 : vector<1x2x8xf32> to vector<2x8xf32>
    %227 = vector.extract_strided_slice %226 {offsets = [0, 0], sizes = [1, 8], strides = [1, 1]} : vector<2x8xf32> to vector<1x8xf32>
    %cst_69 = arith.constant 9.99999974E-6 : f32
    %228 = vector.broadcast %cst_69 : f32 to vector<1x8xf32>
    %229 = arith.addf %224, %228 : vector<1x8xf32>
    %230 = math.rsqrt %229 : vector<1x8xf32>
    %231 = arith.mulf %227, %230 : vector<1x8xf32>
    %232 = vector.extract_strided_slice %226 {offsets = [1, 0], sizes = [1, 8], strides = [1, 1]} : vector<2x8xf32> to vector<1x8xf32>
    %233 = arith.mulf %219, %231 : vector<1x8xf32>
    %234 = arith.subf %232, %233 : vector<1x8xf32>
    %235 = tpu.concatenate %231, %234 in 0 : vector<1x8xf32>, vector<1x8xf32> -> vector<2x8xf32>
    %c0_70 = arith.constant 0 : index
    %c0_71 = arith.constant 0 : index
    %236 = vector.load %arg7[%c0_70, %c0_71] : memref<8x128xf32, #tpu.memory_space<vmem>>, vector<8x32xf32>
    %cst_72 = arith.constant dense<0.000000e+00> : vector<2x32xf32>
    %237 = tpu.matmul %235, %236, %cst_72 {dimension_numbers = #tpu.dot_dimension_numbers<[1], [0], [0], [1], [0, 0, 1, 1], [], []>} : vector<2x8xf32>, vector<8x32xf32>, vector<2x32xf32> -> vector<2x32xf32>
    %238 = vector.extract_strided_slice %237 {offsets = [0, 0], sizes = [1, 32], strides = [1, 1]} : vector<2x32xf32> to vector<1x32xf32>
    %239 = vector.broadcast %238 : vector<1x32xf32> to vector<8x32xf32>
    %240 = arith.mulf %208, %239 : vector<8x32xf32>
    %241 = vector.extract_strided_slice %237 {offsets = [1, 0], sizes = [1, 32], strides = [1, 1]} : vector<2x32xf32> to vector<1x32xf32>
    %242 = vector.broadcast %241 : vector<1x32xf32> to vector<8x32xf32>
    %243 = arith.addf %240, %242 : vector<8x32xf32>
    %cst_73 = arith.constant 0.000000e+00 : f32
    %244 = vector.broadcast %cst_73 : f32 to vector<8x32xf32>
    %245 = arith.maximumf %243, %244 : vector<8x32xf32>
    %246 = vector.extract_strided_slice %245 {offsets = [0, 8], sizes = [8, 24], strides = [1, 1]} : vector<8x32xf32> to vector<8x24xf32>
    %247 = vector.extract_strided_slice %245 {offsets = [0, 0], sizes = [8, 8], strides = [1, 1]} : vector<8x32xf32> to vector<8x8xf32>
    %248 = tpu.concatenate %246, %247 in 1 : vector<8x24xf32>, vector<8x8xf32> -> vector<8x32xf32>
    %249 = arith.maximumf %245, %248 : vector<8x32xf32>
    %250 = vector.extract_strided_slice %249 {offsets = [1, 0], sizes = [7, 32], strides = [1, 1]} : vector<8x32xf32> to vector<7x32xf32>
    %251 = vector.extract_strided_slice %249 {offsets = [0, 0], sizes = [1, 32], strides = [1, 1]} : vector<8x32xf32> to vector<1x32xf32>
    %252 = tpu.concatenate %250, %251 in 0 : vector<7x32xf32>, vector<1x32xf32> -> vector<8x32xf32>
    %253 = arith.maximumf %249, %252 : vector<8x32xf32>
    %254 = tpu.iota {dimensions = array<i32: 0>} : vector<4x8xi32>
    %255 = tpu.iota {dimensions = array<i32: 1>} : vector<4x8xi32>
    %c2_i32_74 = arith.constant 2 : i32
    %256 = vector.broadcast %c2_i32_74 : i32 to vector<4x8xi32>
    %257 = arith.muli %256, %254 : vector<4x8xi32>
    %258 = arith.cmpi eq, %255, %257 : vector<4x8xi32>
    %259 = arith.extui %258 : vector<4x8xi1> to vector<4x8xi32>
    %260 = arith.sitofp %259 : vector<4x8xi32> to vector<4x8xf32>
    %cst_75 = arith.constant dense<0.000000e+00> : vector<4x32xf32>
    %261 = tpu.matmul %260, %253, %cst_75 {dimension_numbers = #tpu.dot_dimension_numbers<[1], [0], [0], [1], [0, 0, 1, 1], [], []>} : vector<4x8xf32>, vector<8x32xf32>, vector<4x32xf32> -> vector<4x32xf32>
    %262 = arith.truncf %261 : vector<4x32xf32> to vector<4x32xbf16>
    %263 = tpu.iota {dimensions = array<i32: 0>} : vector<4x32xi32>
    %c2_i32_76 = arith.constant 2 : i32
    %c0_i32_77 = arith.constant 0 : i32
    %264 = arith.cmpi eq, %c2_i32_76, %c0_i32_77 : i32
    %c1_i32_78 = arith.constant 1 : i32
    %265 = arith.select %264, %c1_i32_78, %c2_i32_76 : i32
    %266 = vector.broadcast %265 : i32 to vector<4x32xi32>
    %267 = arith.remsi %263, %266 : vector<4x32xi32>
    %c0_i32_79 = arith.constant 0 : i32
    %268 = vector.broadcast %c0_i32_79 : i32 to vector<4x32xi32>
    %269 = arith.cmpi ne, %267, %268 : vector<4x32xi32>
    %c0_i32_80 = arith.constant 0 : i32
    %270 = vector.broadcast %c0_i32_80 : i32 to vector<4x32xi32>
    %271 = arith.cmpi slt, %267, %270 : vector<4x32xi32>
    %c0_i32_81 = arith.constant 0 : i32
    %272 = arith.cmpi slt, %265, %c0_i32_81 : i32
    %273 = vector.broadcast %272 : i1 to vector<4x32xi1>
    %274 = vector.broadcast %273 : vector<4x32xi1> to vector<4x32xi1>
    %275 = arith.xori %271, %274 : vector<4x32xi1>
    %276 = arith.andi %275, %269 : vector<4x32xi1>
    %277 = vector.broadcast %265 : i32 to vector<4x32xi32>
    %278 = arith.addi %267, %277 : vector<4x32xi32>
    %279 = arith.select %276, %278, %267 : vector<4x32xi1>, vector<4x32xi32>
    %cst_82 = arith.constant 0.000000e+00 : bf16
    %280 = vector.broadcast %cst_82 : bf16 to vector<4x32xbf16>
    %c0_i32_83 = arith.constant 0 : i32
    %281 = vector.broadcast %c0_i32_83 : i32 to vector<4x32xi32>
    %282 = arith.cmpi eq, %279, %281 : vector<4x32xi32>
    %283 = vector.extract_strided_slice %262 {offsets = [3, 0], sizes = [1, 32], strides = [1, 1]} : vector<4x32xbf16> to vector<1x32xbf16>
    %284 = vector.extract_strided_slice %262 {offsets = [0, 0], sizes = [3, 32], strides = [1, 1]} : vector<4x32xbf16> to vector<3x32xbf16>
    %285 = tpu.concatenate %283, %284 in 0 : vector<1x32xbf16>, vector<3x32xbf16> -> vector<4x32xbf16>
    %286 = arith.select %282, %280, %285 : vector<4x32xi1>, vector<4x32xbf16>
    %c1_i32_84 = arith.constant 1 : i32
    %287 = vector.broadcast %c1_i32_84 : i32 to vector<4x32xi32>
    %288 = arith.cmpi eq, %279, %287 : vector<4x32xi32>
    %289 = vector.extract_strided_slice %262 {offsets = [1, 0], sizes = [3, 32], strides = [1, 1]} : vector<4x32xbf16> to vector<3x32xbf16>
    %290 = vector.extract_strided_slice %262 {offsets = [0, 0], sizes = [1, 32], strides = [1, 1]} : vector<4x32xbf16> to vector<1x32xbf16>
    %291 = tpu.concatenate %289, %290 in 0 : vector<3x32xbf16>, vector<1x32xbf16> -> vector<4x32xbf16>
    %292 = arith.select %288, %280, %291 : vector<4x32xi1>, vector<4x32xbf16>
    %293 = tpu.concatenate %286, %262, %292 in 1 : vector<4x32xbf16>, vector<4x32xbf16>, vector<4x32xbf16> -> vector<4x96xbf16>
    %c0_85 = arith.constant 0 : index
    %c0_86 = arith.constant 0 : index
    %294 = vector.load %arg4[%c0_85, %c0_86] : memref<96x16xbf16, #tpu.memory_space<vmem>>, vector<96x16xbf16>
    %cst_87 = arith.constant dense<0.000000e+00> : vector<4x16xf32>
    %295 = tpu.matmul %293, %294, %cst_87 {dimension_numbers = #tpu.dot_dimension_numbers<[1], [0], [0], [1], [0, 0, 1, 1], [], []>} : vector<4x96xbf16>, vector<96x16xbf16>, vector<4x16xf32> -> vector<4x16xf32>
    %cst_88 = arith.constant dense<0.000000e+00> : vector<16xf32>
    %296 = vector.multi_reduction <add>, %295, %cst_88 [0] : vector<4x16xf32> to vector<16xf32>
    %297 = vector.shape_cast %296 : vector<16xf32> to vector<1x16xf32>
    %298 = arith.mulf %295, %295 : vector<4x16xf32>
    %cst_89 = arith.constant dense<0.000000e+00> : vector<16xf32>
    %299 = vector.multi_reduction <add>, %298, %cst_89 [0] : vector<4x16xf32> to vector<16xf32>
    %300 = vector.shape_cast %299 : vector<16xf32> to vector<1x16xf32>
    %301 = tpu.concatenate %297, %300 in 0 : vector<1x16xf32>, vector<1x16xf32> -> vector<2x16xf32>
    %c0_90 = arith.constant 0 : index
    %c0_91 = arith.constant 0 : index
    %302 = vector.load %arg6[%c0_90, %c0_91] : memref<128x8xf32, #tpu.memory_space<vmem>>, vector<16x8xf32>
    %cst_92 = arith.constant dense<0.000000e+00> : vector<2x8xf32>
    %303 = tpu.matmul %301, %302, %cst_92 {dimension_numbers = #tpu.dot_dimension_numbers<[1], [0], [0], [1], [0, 0, 1, 1], [], []>} : vector<2x16xf32>, vector<16x8xf32>, vector<2x8xf32> -> vector<2x8xf32>
    %cst_93 = arith.constant 1.250000e-01 : f32
    %304 = vector.broadcast %cst_93 : f32 to vector<2x8xf32>
    %305 = arith.mulf %303, %304 : vector<2x8xf32>
    %306 = vector.extract_strided_slice %305 {offsets = [0, 0], sizes = [1, 8], strides = [1, 1]} : vector<2x8xf32> to vector<1x8xf32>
    %307 = vector.extract_strided_slice %305 {offsets = [1, 0], sizes = [1, 8], strides = [1, 1]} : vector<2x8xf32> to vector<1x8xf32>
    %308 = arith.mulf %306, %306 : vector<1x8xf32>
    %309 = arith.subf %307, %308 : vector<1x8xf32>
    %cst_94 = arith.constant 0.000000e+00 : f32
    %310 = vector.broadcast %cst_94 : f32 to vector<1x8xf32>
    %311 = arith.maximumf %309, %310 : vector<1x8xf32>
    %c3 = arith.constant 3 : index
    %c0_95 = arith.constant 0 : index
    %c0_96 = arith.constant 0 : index
    %312 = vector.load %arg5[%c3, %c0_95, %c0_96] : memref<4x2x8xf32, #tpu.memory_space<vmem>>, vector<1x2x8xf32>
    %313 = vector.shape_cast %312 : vector<1x2x8xf32> to vector<2x8xf32>
    %314 = vector.extract_strided_slice %313 {offsets = [0, 0], sizes = [1, 8], strides = [1, 1]} : vector<2x8xf32> to vector<1x8xf32>
    %cst_97 = arith.constant 9.99999974E-6 : f32
    %315 = vector.broadcast %cst_97 : f32 to vector<1x8xf32>
    %316 = arith.addf %311, %315 : vector<1x8xf32>
    %317 = math.rsqrt %316 : vector<1x8xf32>
    %318 = arith.mulf %314, %317 : vector<1x8xf32>
    %319 = vector.extract_strided_slice %313 {offsets = [1, 0], sizes = [1, 8], strides = [1, 1]} : vector<2x8xf32> to vector<1x8xf32>
    %320 = arith.mulf %306, %318 : vector<1x8xf32>
    %321 = arith.subf %319, %320 : vector<1x8xf32>
    %322 = tpu.concatenate %318, %321 in 0 : vector<1x8xf32>, vector<1x8xf32> -> vector<2x8xf32>
    %c0_98 = arith.constant 0 : index
    %c0_99 = arith.constant 0 : index
    %323 = vector.load %arg7[%c0_98, %c0_99] : memref<8x128xf32, #tpu.memory_space<vmem>>, vector<8x16xf32>
    %cst_100 = arith.constant dense<0.000000e+00> : vector<2x16xf32>
    %324 = tpu.matmul %322, %323, %cst_100 {dimension_numbers = #tpu.dot_dimension_numbers<[1], [0], [0], [1], [0, 0, 1, 1], [], []>} : vector<2x8xf32>, vector<8x16xf32>, vector<2x16xf32> -> vector<2x16xf32>
    %325 = vector.extract_strided_slice %324 {offsets = [0, 0], sizes = [1, 16], strides = [1, 1]} : vector<2x16xf32> to vector<1x16xf32>
    %326 = vector.broadcast %325 : vector<1x16xf32> to vector<4x16xf32>
    %327 = arith.mulf %295, %326 : vector<4x16xf32>
    %328 = vector.extract_strided_slice %324 {offsets = [1, 0], sizes = [1, 16], strides = [1, 1]} : vector<2x16xf32> to vector<1x16xf32>
    %329 = vector.broadcast %328 : vector<1x16xf32> to vector<4x16xf32>
    %330 = arith.addf %327, %329 : vector<4x16xf32>
    %cst_101 = arith.constant 0.000000e+00 : f32
    %331 = vector.broadcast %cst_101 : f32 to vector<4x16xf32>
    %332 = arith.maximumf %330, %331 : vector<4x16xf32>
    %333 = vector.extract_strided_slice %332 {offsets = [0, 8], sizes = [4, 8], strides = [1, 1]} : vector<4x16xf32> to vector<4x8xf32>
    %334 = vector.extract_strided_slice %332 {offsets = [0, 0], sizes = [4, 8], strides = [1, 1]} : vector<4x16xf32> to vector<4x8xf32>
    %335 = tpu.concatenate %333, %334 in 1 : vector<4x8xf32>, vector<4x8xf32> -> vector<4x16xf32>
    %336 = arith.maximumf %332, %335 : vector<4x16xf32>
    %337 = vector.extract_strided_slice %336 {offsets = [1, 0], sizes = [3, 16], strides = [1, 1]} : vector<4x16xf32> to vector<3x16xf32>
    %338 = vector.extract_strided_slice %336 {offsets = [0, 0], sizes = [1, 16], strides = [1, 1]} : vector<4x16xf32> to vector<1x16xf32>
    %339 = tpu.concatenate %337, %338 in 0 : vector<3x16xf32>, vector<1x16xf32> -> vector<4x16xf32>
    %340 = arith.maximumf %336, %339 : vector<4x16xf32>
    %341 = tpu.iota {dimensions = array<i32: 0>} : vector<2x4xi32>
    %342 = tpu.iota {dimensions = array<i32: 1>} : vector<2x4xi32>
    %c2_i32_102 = arith.constant 2 : i32
    %343 = vector.broadcast %c2_i32_102 : i32 to vector<2x4xi32>
    %344 = arith.muli %343, %341 : vector<2x4xi32>
    %345 = arith.cmpi eq, %342, %344 : vector<2x4xi32>
    %346 = arith.extui %345 : vector<2x4xi1> to vector<2x4xi32>
    %347 = arith.sitofp %346 : vector<2x4xi32> to vector<2x4xf32>
    %cst_103 = arith.constant dense<0.000000e+00> : vector<2x16xf32>
    %348 = tpu.matmul %347, %340, %cst_103 {dimension_numbers = #tpu.dot_dimension_numbers<[1], [0], [0], [1], [0, 0, 1, 1], [], []>} : vector<2x4xf32>, vector<4x16xf32>, vector<2x16xf32> -> vector<2x16xf32>
    %349 = vector.extract_strided_slice %348 {offsets = [0, 0], sizes = [2, 8], strides = [1, 1]} : vector<2x16xf32> to vector<2x8xf32>
    %c0_104 = arith.constant 0 : index
    %c0_105 = arith.constant 0 : index
    %350 = vector.load %arg8[%c0_104, %c0_105] : memref<2x8xf32, #tpu.memory_space<vmem>>, vector<2x8xf32>
    tpu.vector_store %arg8[%c0_104, %c0_105], %349 {strides = array<i32>} : memref<2x8xf32, #tpu.memory_space<vmem>>, vector<2x8xf32>,
    return
  }
}

</mosaic_0001>

<llo_original>
// kernel: tpu_custom_call.1
$region0: #{tpu_custom_call.1}
  #allocation0 [shape = 'u32[]', space=smem, size = 0x4, offset = 0x4, fixed_abs, tag = 'smem constant byte address 0x4 - core index']
  #allocation1 [shape = 'u32[144,128]{1,0:T(1,128)}', space=vmem, size = 0x12000, scoped, tag = 'internal scratch']
  %s0 = inlined_call_operand.vmem [shape: f32[32,64], index: 0, kind: input, shape index: {}]
  %s1 = inlined_call_operand.vmem [shape: bf16[192,128], index: 1, kind: input, shape index: {}]
  %s2 = inlined_call_operand.vmem [shape: bf16[384,64], index: 2, kind: input, shape index: {}]
  %s3 = inlined_call_operand.vmem [shape: bf16[192,32], index: 3, kind: input, shape index: {}]
  %s4 = inlined_call_operand.vmem [shape: bf16[96,16], index: 4, kind: input, shape index: {}]
  %s5 = inlined_call_operand.vmem [shape: f32[4,2,8], index: 5, kind: input, shape index: {}]
  %s6 = inlined_call_operand.vmem [shape: f32[128,8], index: 6, kind: input, shape index: {}]
  %s7 = inlined_call_operand.vmem [shape: f32[8,128], index: 7, kind: input, shape index: {}]
  %s8 = inlined_call_operand.hbm [shape: f32[2,8], index: 8, kind: output, shape index: {}]
  %s9 = sld [smem:[#allocation0]]
  $region42: #{tpu_custom_call.1} parent=0
    _
  %s11 = ssub.s32 1, %s9
  %s12 = scalar_select 0, %s11, %s9
  $region1: #{tpu_custom_call.1} parent=0
    #allocation2 [shape = 'u8[1024]{0}', space=vmem, size = 0x400, scoped, tag = 'output window, operand 0, single buffered']
    #allocation3 [shape = 's32[1]{0}', space=sflag, size = 0x4, scoped, tag = 'scoped memory for tpu_custom_call.1']
    %13 = vsyncpa [#allocation3], 0
    // Predicated region
    $region2: #{tpu_custom_call.1} parent=1 // pred_check
      _
    $region3: #{tpu_custom_call.1} parent=1 // pred_check_branch
      %15 = sbr.rel (0) target = $region5
    $region4: #{tpu_custom_call.1} parent=1 // pred_region
      _
    $region5: #{tpu_custom_call.1} parent=1 // pred_fallthru
      _
    // Predicated region
    $region6: #{tpu_custom_call.1} parent=1 // pred_check
      _
    $region7: #{tpu_custom_call.1} parent=1 // pred_check_branch
      %17 = sbr.rel (0) target = $region9
    $region8: #{tpu_custom_call.1} parent=1 // pred_region
      _
    $region9: #{tpu_custom_call.1} parent=1 // pred_fallthru
      _
    // Predicated region
    $region10: #{tpu_custom_call.1} parent=1 // pred_check
      _
    $region11: #{tpu_custom_call.1} parent=1 // pred_check_branch
      %19 = sbr.rel (0) target = $region13
    $region12: #{tpu_custom_call.1} parent=1 // pred_region
      _
    $region13: #{tpu_custom_call.1} parent=1 // pred_fallthru
      _
    // Predicated region
    $region14: #{tpu_custom_call.1} parent=1 // pred_check
      _
    $region15: #{tpu_custom_call.1} parent=1 // pred_check_branch
      %21 = sbr.rel (0) target = $region17
    $region16: #{tpu_custom_call.1} parent=1 // pred_region
      _
    $region17: #{tpu_custom_call.1} parent=1 // pred_fallthru
      _
    // Predicated region
    $region18: #{tpu_custom_call.1} parent=1 // pred_check
      _
    $region19: #{tpu_custom_call.1} parent=1 // pred_check_branch
      %23 = sbr.rel (0) target = $region21
    $region20: #{tpu_custom_call.1} parent=1 // pred_region
      _
    $region21: #{tpu_custom_call.1} parent=1 // pred_fallthru
      _
    // Predicated region
    $region22: #{tpu_custom_call.1} parent=1 // pred_check
      _
    $region23: #{tpu_custom_call.1} parent=1 // pred_check_branch
      %25 = sbr.rel (0) target = $region25
    $region24: #{tpu_custom_call.1} parent=1 // pred_region
      _
    $region25: #{tpu_custom_call.1} parent=1 // pred_fallthru
      _
    // Predicated region
    $region26: #{tpu_custom_call.1} parent=1 // pred_check
      _
    $region27: #{tpu_custom_call.1} parent=1 // pred_check_branch
      %27 = sbr.rel (0) target = $region29
    $region28: #{tpu_custom_call.1} parent=1 // pred_region
      _
    $region29: #{tpu_custom_call.1} parent=1 // pred_fallthru
      _
    // Predicated region
    $region30: #{tpu_custom_call.1} parent=1 // pred_check
      _
    $region31: #{tpu_custom_call.1} parent=1 // pred_check_branch
      %29 = sbr.rel (0) target = $region33
    $region32: #{tpu_custom_call.1} parent=1 // pred_region
      _
    $region33: #{tpu_custom_call.1} parent=1 // pred_fallthru
      _
    %v33 = vld [vmem:[%s0] sm:$0xff]
    %v34 = vld [vmem:[%s0 + $0x8] sm:$0xff]
    %v35 = vld [vmem:[%s0 + $0x10] sm:$0xff]
    %v36 = vld [vmem:[%s0 + $0x18] sm:$0xff]
    %v37 = vpack.c.bf16 %v34, %v33
    %v38 = vpack.c.bf16 %v36, %v35
    %v39 = vlaneseq
    %v40 = vshrl.u32 %v39, 7
    %v41 = vadd.s32 %v40, 8
    %v42 = vadd.s32 %v40, 16
    %v43 = vadd.s32 %v40, 24
    %vm44 = vcmp.lt.s32.totalorder %v40, 0
    %v45 = vsub.s32 0, %v40
    %v46 = vsel %vm44, %v45, %v40
    %v47 = vshrl.u32 %v46, 4
    %v48 = vand.u32 %v46, 15
    %v49 = vsub.s32 0, %v48
    %v50 = vsel %vm44, %v49, %v48
    %vm51 = vcmp.lt.s32.totalorder %v41, 0
    %v52 = vsub.s32 0, %v41
    %v53 = vsel %vm51, %v52, %v41
    %v54 = vshrl.u32 %v53, 4
    %v55 = vand.u32 %v53, 15
    %v56 = vsub.s32 0, %v55
    %v57 = vsel %vm51, %v56, %v55
    %vm58 = vcmp.lt.s32.totalorder %v42, 0
    %v59 = vsub.s32 0, %v42
    %v60 = vsel %vm58, %v59, %v42
    %v61 = vshrl.u32 %v60, 4
    %v62 = vand.u32 %v60, 15
    %v63 = vsub.s32 0, %v62
    %v64 = vsel %vm58, %v63, %v62
    %vm65 = vcmp.lt.s32.totalorder %v43, 0
    %v66 = vsub.s32 0, %v43
    %v67 = vsel %vm65, %v66, %v43
    %v68 = vshrl.u32 %v67, 4
    %v69 = vand.u32 %v67, 15
    %v70 = vsub.s32 0, %v69
    %v71 = vsel %vm65, %v70, %v69
    %vm72 = vcmp.ne.s32.totalorder %v50, 0
    %vm73 = vcmp.ne.s32.totalorder %v57, 0
    %vm74 = vcmp.ne.s32.totalorder %v64, 0
    %vm75 = vcmp.ne.s32.totalorder %v71, 0
    %vm76 = vcmp.lt.s32.totalorder %v50, 0
    %vm77 = vcmp.lt.s32.totalorder %v57, 0
    %vm78 = vcmp.lt.s32.totalorder %v64, 0
    %vm79 = vcmp.lt.s32.totalorder %v71, 0
    %vm80 = vmand %vm76, %vm72
    %vm81 = vmand %vm77, %vm73
    %vm82 = vmand %vm78, %vm74
    %vm83 = vmand %vm79, %vm75
    %v84 = vadd.s32 %v50, 16
    %v85 = vadd.s32 %v57, 16
    %v86 = vadd.s32 %v64, 16
    %v87 = vadd.s32 %v71, 16
    %v88 = vsel %vm80, %v84, %v50
    %v89 = vsel %vm81, %v85, %v57
    %v90 = vsel %vm82, %v86, %v64
    %v91 = vsel %vm83, %v87, %v71
    %vm92 = vcmp.eq.s32.totalorder %v88, 0
    %vm93 = vcmp.eq.s32.totalorder %v89, 0
    %vm94 = vcmp.eq.s32.totalorder %v90, 0
    %vm95 = vcmp.eq.s32.totalorder %v91, 0
    %v97 = vshrl.u32 %v38, 16
    %v99 = vrot.slane %v97, 7
    %vm101 = vsmask.f32 256
    %v103 = vshrl.u32 %v37, 16
    %v105 = vrot.slane %v103, 7
    %v106 = vshll.u32 %v37, 16
    %v108 = vor.u32 %v105, %v106
    %v109 = vshll.u32 %v38, 16
    %v111 = vor.u32 %v99, %v109
    %v112 = vsel %vm101, %v105, %v111
    %vm115 = vcmask 1040384
    %vm116 = vmand %vm115, %vm101
    %v117 = vsel %vm116, %v99, %v108
    %vm118 = vmpackc.low %vm92, %vm92
    %vm119 = vmpackc.low %vm93, %vm93
    %vm120 = vmpackc.low %vm94, %vm94
    %vm121 = vmpackc.low %vm95, %vm95
    %v122 = vsel %vm118, 65537, 0
    %v123 = vsel %vm119, 65537, 0
    %v124 = vsel %vm120, 65537, 0
    %v125 = vsel %vm121, 65537, 0
    %v126 = vunpack.c.l.b16 %v122
    %v127 = vunpack.c.l.b16 %v123
    %v128 = vunpack.c.l.b16 %v124
    %v129 = vunpack.c.l.b16 %v125
    %v130 = vpack.c.b16 %v127, %v126
    %v131 = vpack.c.b16 %v129, %v128
    %vm132 = vcmp.ne.s16.totalorder %v130, 0
    %vm133 = vcmp.ne.s16.totalorder %v131, 0
    %v134 = vsel %vm132, 0, %v117
    %v135 = vsel %vm133, 0, %v112
    %vm136 = vcmp.eq.s32.totalorder %v88, 15
    %vm137 = vcmp.eq.s32.totalorder %v89, 15
    %vm138 = vcmp.eq.s32.totalorder %v90, 15
    %vm139 = vcmp.eq.s32.totalorder %v91, 15
    %vm140 = vsmask.f32 7424
    %v141 = vrot.slane %v106, 1
    %v142 = vor.u32 %v103, %v141
    %v143 = vrot.slane %v109, 1
    %v144 = vsel %vm140, %v142, %v143
    %v145 = vor.u32 %v97, %v143
    %vm149 = vcmask 1047552
    %vm150 = vmand %vm149, %vm140
    %v151 = vsel %vm150, %v145, %v141
    %vm152 = vmpackc.low %vm136, %vm136
    %vm153 = vmpackc.low %vm137, %vm137
    %vm154 = vmpackc.low %vm138, %vm138
    %vm155 = vmpackc.low %vm139, %vm139
    %v156 = vsel %vm152, 65537, 0
    %v157 = vsel %vm153, 65537, 0
    %v158 = vsel %vm154, 65537, 0
    %v159 = vsel %vm155, 65537, 0
    %v160 = vunpack.c.l.b16 %v156
    %v161 = vunpack.c.l.b16 %v157
    %v162 = vunpack.c.l.b16 %v158
    %v163 = vunpack.c.l.b16 %v159
    %v164 = vpack.c.b16 %v161, %v160
    %v165 = vpack.c.b16 %v163, %v162
    %vm166 = vcmp.ne.s16.totalorder %v164, 0
    %vm167 = vcmp.ne.s16.totalorder %v165, 0
    %v168 = vsel %vm166, 0, %v144
    %v169 = vsel %vm167, 0, %v151
    %172 = vrot.lane.b32.xlu0 %v37, 64
    %v173 = vpop.permute.xlu0 %172
    %174 = vrot.lane.b32.xlu0 %v38, 64
    %v175 = vpop.permute.xlu0 %174
    %vm176 = vcmask 523264
    %v179 = vsel %vm176, %v134, %v173
    %v183 = vsel %vm176, %v135, %v175
    %v185 = vld [vmem:[%s1] sm:$0xf]
    %v186 = vld [vmem:[%s1 + $0x4] sm:$0xf]
    %v187 = vld [vmem:[%s1 + $0x8] sm:$0xf]
    %v188 = vld [vmem:[%s1 + $0xc] sm:$0xf]
    %v189 = vld [vmem:[%s1 + $0x10] sm:$0xf]
    %v190 = vld [vmem:[%s1 + $0x14] sm:$0xf]
    %v191 = vld [vmem:[%s1 + $0x18] sm:$0xf]
    %v192 = vld [vmem:[%s1 + $0x1c] sm:$0xf]
    %v193 = vld [vmem:[%s1 + $0x20] sm:$0xf]
    %v194 = vld [vmem:[%s1 + $0x24] sm:$0xf]
    %v195 = vld [vmem:[%s1 + $0x28] sm:$0xf]
    %v196 = vld [vmem:[%s1 + $0x2c] sm:$0xf]
    %v197 = vld [vmem:[%s1 + $0x30] sm:$0xf]
    %v198 = vld [vmem:[%s1 + $0x34] sm:$0xf]
    %v199 = vld [vmem:[%s1 + $0x38] sm:$0xf]
    %v200 = vld [vmem:[%s1 + $0x3c] sm:$0xf]
    %v201 = vld [vmem:[%s1 + $0x40] sm:$0xf]
    %v202 = vld [vmem:[%s1 + $0x44] sm:$0xf]
    %v203 = vld [vmem:[%s1 + $0x48] sm:$0xf]
    %v204 = vld [vmem:[%s1 + $0x4c] sm:$0xf]
    %v205 = vld [vmem:[%s1 + $0x50] sm:$0xf]
    %v206 = vld [vmem:[%s1 + $0x54] sm:$0xf]
    %v207 = vld [vmem:[%s1 + $0x58] sm:$0xf]
    %v208 = vld [vmem:[%s1 + $0x5c] sm:$0xf]
    %v233 = vunpack.c.l.b16 %v185
    %v234 = vunpack.c.l.b16 %v186
    %v235 = vunpack.c.l.b16 %v187
    %v236 = vunpack.c.l.b16 %v188
    %v237 = vunpack.c.l.b16 %v189
    %v238 = vunpack.c.l.b16 %v190
    %v239 = vunpack.c.l.b16 %v191
    %v240 = vunpack.c.l.b16 %v192
    %v241 = vunpack.c.l.b16 %v193
    %v242 = vunpack.c.l.b16 %v194
    %v243 = vunpack.c.l.b16 %v195
    %v244 = vunpack.c.l.b16 %v196
    %v245 = vunpack.c.l.b16 %v197
    %v246 = vunpack.c.l.b16 %v198
    %v247 = vunpack.c.l.b16 %v199
    %v248 = vunpack.c.l.b16 %v200
    %v249 = vunpack.c.l.b16 %v201
    %v250 = vunpack.c.l.b16 %v202
    %v251 = vunpack.c.l.b16 %v203
    %v252 = vunpack.c.l.b16 %v204
    %v253 = vunpack.c.l.b16 %v205
    %v254 = vunpack.c.l.b16 %v206
    %v255 = vunpack.c.l.b16 %v207
    %v256 = vunpack.c.l.b16 %v208
    %v257 = vpack.c.b16 %v234, %v233
    %v258 = vpack.c.b16 %v236, %v235
    %v259 = vpack.c.b16 %v238, %v237
    %v260 = vpack.c.b16 %v240, %v239
    %v261 = vpack.c.b16 %v242, %v241
    %v262 = vpack.c.b16 %v244, %v243
    %v263 = vpack.c.b16 %v246, %v245
    %v264 = vpack.c.b16 %v248, %v247
    %v265 = vpack.c.b16 %v250, %v249
    %v266 = vpack.c.b16 %v252, %v251
    %v267 = vpack.c.b16 %v254, %v253
    %v268 = vpack.c.b16 %v256, %v255
    %v282 = vsel %vm176, %v168, 0
    %v285 = vsel %vm176, %v169, 0
    %287 = vmatprep.subr.bf16.mxu0 0
    %288 = vmatpush1.bf16.msra.mxu0 %v257
    %289 = vmatprep.subr.bf16.mxu0 0
    %290 = vmatpush1.bf16.msra.mxu0 %v258
    %291 = vmatprep.subr.bf16.mxu0 0
    %292 = vmatpush1.bf16.msra.mxu0 %v259
    %293 = vmatprep.subr.bf16.mxu0 0
    %294 = vmatpush1.bf16.msra.mxu0 %v260
    %295 = vmatprep.subr.bf16.mxu0 0
    %296 = vmatpush1.bf16.msra.mxu0 %v261
    %297 = vmatprep.subr.bf16.mxu0 0
    %298 = vmatpush1.bf16.msra.mxu0 %v262
    %299 = vmatprep.subr.bf16.mxu0 0
    %300 = vmatpush1.bf16.msra.mxu0 %v263
    %301 = vmatprep.subr.bf16.mxu0 0
    %302 = vmatpush1.bf16.msra.mxu0 %v264
    %303 = vmatprep.subr.bf16.mxu0 0
    %304 = vmatpush1.bf16.msra.mxu0 %v265
    %305 = vmatprep.subr.bf16.mxu0 0
    %306 = vmatpush1.bf16.msra.mxu0 %v266
    %307 = vmatprep.subr.bf16.mxu0 0
    %308 = vmatpush1.bf16.msra.mxu0 %v267
    %309 = vmatprep.subr.bf16.mxu0 0
    %310 = vmatpush1.bf16.msra.mxu0 %v268
    %311 = vmatprep.subr.bf16.mxu0 0
    %312 = vmatpush1.bf16.msra.mxu0 0
    %313 = vmatprep.subr.bf16.mxu0 0
    %314 = vmatpush1.bf16.msra.mxu0 0
    %315 = vmatprep.subr.bf16.mxu0 0
    %316 = vmatpush1.bf16.msra.mxu0 0
    %317 = vmatprep.subr.bf16.mxu0 0
    %318 = vmatpush1.bf16.msra.mxu0 0
    %319 = vmatprep.mubr.bf16.mxu0 %v282
    %320 = vmatmul.mubr.bf16.gmra.mrb[0].mxu0 %v179
    %v321 = vpop.f32.mrb[0].mxu0
    %v322 = vadd.f32 0.0, %v321
    %v323 = vpop.f32.mrb[0].mxu0
    %v324 = vpop.f32.mrb[0].mxu0
    %v325 = vadd.f32 0.0, %v324
    %v326 = vpop.f32.mrb[0].mxu0
    %327 = vmatprep.mubr.bf16.mxu0 %v285
    %328 = vmatmul.mubr.bf16.gmra.mrb[0].mxu0 %v183
    %v329 = vpop.f32.mrb[0].mxu0
    %v330 = vadd.f32 0.0, %v329
    %v331 = vpop.f32.mrb[0].mxu0
    %v332 = vpop.f32.mrb[0].mxu0
    %v333 = vadd.f32 0.0, %v332
    %v334 = vpop.f32.mrb[0].mxu0
    %335 = vdwg.mxu0
    %v336 = vadd.f32 %v322, %v325
    %v337 = vadd.f32 %v336, %v330
    %v338 = vadd.f32 %v337, %v333
    %v339 = vrot.slane %v338, 4
    %v340 = vadd.f32 %v338, %v339
    %v341 = vrot.slane %v340, 2
    %v342 = vadd.f32 %v340, %v341
    %v343 = vrot.slane %v342, 1
    %v344 = vadd.f32 %v342, %v343
    %v345 = vmul.f32 %v322, %v322
    %v346 = vmul.f32 %v325, %v325
    %v347 = vmul.f32 %v330, %v330
    %v348 = vmul.f32 %v333, %v333
    %v349 = vadd.f32 %v345, %v346
    %v350 = vadd.f32 %v349, %v347
    %v351 = vadd.f32 %v350, %v348
    %v352 = vrot.slane %v351, 4
    %v353 = vadd.f32 %v351, %v352
    %v354 = vrot.slane %v353, 2
    %v355 = vadd.f32 %v353, %v354
    %v356 = vrot.slane %v355, 1
    %v357 = vadd.f32 %v355, %v356
    %vm358 = vcmask 1040384
    %v359 = vsel %vm358, %v344, %v357
    %v360 = vld [vmem:[%s6] sm:$0xff]
    %v361 = vld [vmem:[%s6 + $0x8] sm:$0xff]
    %v362 = vld [vmem:[%s6 + $0x10] sm:$0xff]
    %v363 = vld [vmem:[%s6 + $0x18] sm:$0xff]
    %v364 = vld [vmem:[%s6 + $0x20] sm:$0xff]
    %v365 = vld [vmem:[%s6 + $0x28] sm:$0xff]
    %v366 = vld [vmem:[%s6 + $0x30] sm:$0xff]
    %v367 = vld [vmem:[%s6 + $0x38] sm:$0xff]
    %v368 = vld [vmem:[%s6 + $0x40] sm:$0xff]
    %v369 = vld [vmem:[%s6 + $0x48] sm:$0xff]
    %v370 = vld [vmem:[%s6 + $0x50] sm:$0xff]
    %v371 = vld [vmem:[%s6 + $0x58] sm:$0xff]
    %v372 = vld [vmem:[%s6 + $0x60] sm:$0xff]
    %v373 = vld [vmem:[%s6 + $0x68] sm:$0xff]
    %v374 = vld [vmem:[%s6 + $0x70] sm:$0xff]
    %v375 = vld [vmem:[%s6 + $0x78] sm:$0xff]
    %376 = vmatprep.subr.mxu0 0.0
    %377 = vmatpush1.msra.mxu0 %v360
    %378 = vmatprep.subr.mxu0 0.0
    %379 = vmatpush1.msra.mxu0 %v361
    %380 = vmatprep.subr.mxu0 0.0
    %381 = vmatpush1.msra.mxu0 %v362
    %382 = vmatprep.subr.mxu0 0.0
    %383 = vmatpush1.msra.mxu0 %v363
    %384 = vmatprep.subr.mxu0 0.0
    %385 = vmatpush1.msra.mxu0 %v364
    %386 = vmatprep.subr.mxu0 0.0
    %387 = vmatpush1.msra.mxu0 %v365
    %388 = vmatprep.subr.mxu0 0.0
    %389 = vmatpush1.msra.mxu0 %v366
    %390 = vmatprep.subr.mxu0 0.0
    %391 = vmatpush1.msra.mxu0 %v367
    %392 = vmatprep.subr.mxu0 0.0
    %393 = vmatpush1.msra.mxu0 %v368
    %394 = vmatprep.subr.mxu0 0.0
    %395 = vmatpush1.msra.mxu0 %v369
    %396 = vmatprep.subr.mxu0 0.0
    %397 = vmatpush1.msra.mxu0 %v370
    %398 = vmatprep.subr.mxu0 0.0
    %399 = vmatpush1.msra.mxu0 %v371
    %400 = vmatprep.subr.mxu0 0.0
    %401 = vmatpush1.msra.mxu0 %v372
    %402 = vmatprep.subr.mxu0 0.0
    %403 = vmatpush1.msra.mxu0 %v373
    %404 = vmatprep.subr.mxu0 0.0
    %405 = vmatpush1.msra.mxu0 %v374
    %406 = vmatprep.subr.mxu0 0.0
    %407 = vmatpush1.msra.mxu0 %v375
    %408 = vmatprep.subr.mxu0 0.0
    %409 = vmatpush1.msra.mxu0 0.0
    %410 = vmatprep.subr.mxu0 0.0
    %411 = vmatpush1.msra.mxu0 0.0
    %412 = vmatprep.subr.mxu0 0.0
    %413 = vmatpush1.msra.mxu0 0.0
    %414 = vmatprep.subr.mxu0 0.0
    %415 = vmatpush1.msra.mxu0 0.0
    %416 = vmatprep.subr.mxu0 0.0
    %417 = vmatpush1.msra.mxu0 0.0
    %418 = vmatprep.subr.mxu0 0.0
    %419 = vmatpush1.msra.mxu0 0.0
    %420 = vmatprep.subr.mxu0 0.0
    %421 = vmatpush1.msra.mxu0 0.0
    %422 = vmatprep.subr.mxu0 0.0
    %423 = vmatpush1.msra.mxu0 0.0
    %424 = vmatprep.subr.mxu0 0.0
    %425 = vmatpush1.msra.mxu0 0.0
    %426 = vmatprep.subr.mxu0 0.0
    %427 = vmatpush1.msra.mxu0 0.0
    %428 = vmatprep.subr.mxu0 0.0
    %429 = vmatpush1.msra.mxu0 0.0
    %430 = vmatprep.subr.mxu0 0.0
    %431 = vmatpush1.msra.mxu0 0.0
    %432 = vmatprep.subr.mxu0 0.0
    %433 = vmatpush1.msra.mxu0 0.0
    %434 = vmatprep.subr.mxu0 0.0
    %435 = vmatpush1.msra.mxu0 0.0
    %436 = vmatprep.subr.mxu0 0.0
    %437 = vmatpush1.msra.mxu0 0.0
    %438 = vmatprep.subr.mxu0 0.0
    %439 = vmatpush1.msra.mxu0 0.0
    %440 = vmatprep.mubr.f32.mxu0 0.0
    %441 = vmatmul.mubr.f32.gmra.mrb[0].mxu0 %v359
    %v442 = vpop.f32.mrb[0].mxu0
    %v443 = vadd.f32 0.0, %v442
    %v444 = vpop.f32.mrb[0].mxu0
    %445 = vdwg.mxu0
    %v446 = vmul.f32 %v443, 0.001953125
    %v447 = vmul.f32 %v446, %v446
    %v449 = vrot.slane %v447, 7
    %v451 = vsub.f32 %v446, %v449
    %v452 = vmax.f32 %v451, 0.0
    %v453 = vld [vmem:[%s5] sm:$0x3]
    %v454 = vadd.f32 %v452, 1e-05
    %v455 = vrsqrt.pop %v454
    %v457 = vrot.slane %v455, 1
    %v459 = vmul.f32 %v453, %v457
    %v460 = vmul.f32 %v446, %v459
    %v462 = vrot.slane %v460, 7
    %v464 = vsub.f32 %v453, %v462
    %v465 = vsel %vm358, %v459, %v464
    %v466 = vld [vmem:[%s7] sm:$0xff]
    %vm467 = vcmask 64512
    %v469 = vsel %vm467, %v465, 0
    %471 = vmatprep.subr.mxu0 0.0
    %472 = vmatpush1.msra.mxu0 %v466
    %473 = vmatprep.subr.mxu0 0.0
    %474 = vmatpush1.msra.mxu0 0.0
    %475 = vmatprep.subr.mxu0 0.0
    %476 = vmatpush1.msra.mxu0 0.0
    %477 = vmatprep.subr.mxu0 0.0
    %478 = vmatpush1.msra.mxu0 0.0
    %479 = vmatprep.subr.mxu0 0.0
    %480 = vmatpush1.msra.mxu0 0.0
    %481 = vmatprep.subr.mxu0 0.0
    %482 = vmatpush1.msra.mxu0 0.0
    %483 = vmatprep.subr.mxu0 0.0
    %484 = vmatpush1.msra.mxu0 0.0
    %485 = vmatprep.subr.mxu0 0.0
    %486 = vmatpush1.msra.mxu0 0.0
    %487 = vmatprep.subr.mxu0 0.0
    %488 = vmatpush1.msra.mxu0 0.0
    %489 = vmatprep.subr.mxu0 0.0
    %490 = vmatpush1.msra.mxu0 0.0
    %491 = vmatprep.subr.mxu0 0.0
    %492 = vmatpush1.msra.mxu0 0.0
    %493 = vmatprep.subr.mxu0 0.0
    %494 = vmatpush1.msra.mxu0 0.0
    %495 = vmatprep.subr.mxu0 0.0
    %496 = vmatpush1.msra.mxu0 0.0
    %497 = vmatprep.subr.mxu0 0.0
    %498 = vmatpush1.msra.mxu0 0.0
    %499 = vmatprep.subr.mxu0 0.0
    %500 = vmatpush1.msra.mxu0 0.0
    %501 = vmatprep.subr.mxu0 0.0
    %502 = vmatpush1.msra.mxu0 0.0
    %503 = vmatprep.subr.mxu0 0.0
    %504 = vmatpush1.msra.mxu0 0.0
    %505 = vmatprep.subr.mxu0 0.0
    %506 = vmatpush1.msra.mxu0 0.0
    %507 = vmatprep.subr.mxu0 0.0
    %508 = vmatpush1.msra.mxu0 0.0
    %509 = vmatprep.subr.mxu0 0.0
    %510 = vmatpush1.msra.mxu0 0.0
    %511 = vmatprep.subr.mxu0 0.0
    %512 = vmatpush1.msra.mxu0 0.0
    %513 = vmatprep.subr.mxu0 0.0
    %514 = vmatpush1.msra.mxu0 0.0
    %515 = vmatprep.subr.mxu0 0.0
    %516 = vmatpush1.msra.mxu0 0.0
    %517 = vmatprep.subr.mxu0 0.0
    %518 = vmatpush1.msra.mxu0 0.0
    %519 = vmatprep.subr.mxu0 0.0
    %520 = vmatpush1.msra.mxu0 0.0
    %521 = vmatprep.subr.mxu0 0.0
    %522 = vmatpush1.msra.mxu0 0.0
    %523 = vmatprep.subr.mxu0 0.0
    %524 = vmatpush1.msra.mxu0 0.0
    %525 = vmatprep.subr.mxu0 0.0
    %526 = vmatpush1.msra.mxu0 0.0
    %527 = vmatprep.subr.mxu0 0.0
    %528 = vmatpush1.msra.mxu0 0.0
    %529 = vmatprep.subr.mxu0 0.0
    %530 = vmatpush1.msra.mxu0 0.0
    %531 = vmatprep.subr.mxu0 0.0
    %532 = vmatpush1.msra.mxu0 0.0
    %533 = vmatprep.subr.mxu0 0.0
    %534 = vmatpush1.msra.mxu0 0.0
    %535 = vmatprep.mubr.f32.mxu0 0.0
    %536 = vmatmul.mubr.f32.gmra.mrb[0].mxu0 %v469
    %v537 = vpop.f32.mrb[0].mxu0
    %v538 = vadd.f32 0.0, %v537
    %v539 = vpop.f32.mrb[0].mxu0
    %540 = vdwg.mxu0
    %v541 = vlaneseq
    %v542 = vshrl.u32 %v541, 7
    %v543 = vsub.s32 0, %v542
    %v544 = vrot.slane %v538, %v543
    %v545 = vmul.f32 %v322, %v544
    %v546 = vmul.f32 %v325, %v544
    %v547 = vmul.f32 %v330, %v544
    %v548 = vmul.f32 %v333, %v544
    %v549 = vlaneseq
    %v550 = vshrl.u32 %v549, 7
    %v551 = vsub.s32 1, %v550
    %v552 = vrot.slane %v538, %v551
    %v553 = vadd.f32 %v545, %v552
    %v554 = vadd.f32 %v546, %v552
    %v555 = vadd.f32 %v547, %v552
    %v556 = vadd.f32 %v548, %v552
    %v557 = vmax.f32 %v553, 0.0
    %v558 = vmax.f32 %v554, 0.0
    %v559 = vmax.f32 %v555, 0.0
    %v560 = vmax.f32 %v556, 0.0
    %565 = vrot.lane.b32.xlu0 %v557, 120
    %v566 = vpop.permute.xlu0 %565
    %567 = vrot.lane.b32.xlu0 %v558, 120
    %v568 = vpop.permute.xlu0 %567
    %569 = vrot.lane.b32.xlu0 %v559, 120
    %v570 = vpop.permute.xlu0 %569
    %571 = vrot.lane.b32.xlu0 %v560, 120
    %v572 = vpop.permute.xlu0 %571
    %v577 = vmax.f32 %v557, %v566
    %v578 = vmax.f32 %v558, %v568
    %v579 = vmax.f32 %v559, %v570
    %v580 = vmax.f32 %v560, %v572
    %vm585 = vcmask 1046528
    %v586 = vrot.slane %v577, 1
    %v587 = vrot.slane %v578, 1
    %v588 = vsel %vm585, %v586, %v587
    %v589 = vrot.slane %v579, 1
    %v590 = vsel %vm585, %v587, %v589
    %v591 = vrot.slane %v580, 1
    %v592 = vsel %vm585, %v589, %v591
    %v598 = vsel %vm585, %v591, %v586
    %v599 = vmax.f32 %v577, %v588
    %v600 = vmax.f32 %v578, %v590
    %v601 = vmax.f32 %v579, %v592
    %v602 = vmax.f32 %v580, %v598
    %v603 = vlaneseq
    %v604 = vand.u32 %v603, 127
    %v605 = vmul.u32 %v40, 2
    %v606 = vmul.u32 %v41, 2
    %vm607 = vcmp.eq.s32.totalorder %v604, %v605
    %vm608 = vcmp.eq.s32.totalorder %v604, %v606
    %v609 = vsel %vm607, 1, 0
    %v610 = vsel %vm608, 1, 0
    %v611 = vcvt.s32.f32 %v609
    %v612 = vcvt.s32.f32 %v610
    %vm613 = vcmask 261120
    %v615 = vsel %vm613, %v611, 0
    %v618 = vsel %vm613, %v612, 0
    %620 = vmatprep.subr.mxu0 0.0
    %621 = vmatpush1.msra.mxu0 %v599
    %622 = vmatprep.subr.mxu0 0.0
    %623 = vmatpush1.msra.mxu0 %v600
    %624 = vmatprep.subr.mxu0 0.0
    %625 = vmatpush1.msra.mxu0 %v601
    %626 = vmatprep.subr.mxu0 0.0
    %627 = vmatpush1.msra.mxu0 %v602
    %628 = vmatprep.subr.mxu0 0.0
    %629 = vmatpush1.msra.mxu0 0.0
    %630 = vmatprep.subr.mxu0 0.0
    %631 = vmatpush1.msra.mxu0 0.0
    %632 = vmatprep.subr.mxu0 0.0
    %633 = vmatpush1.msra.mxu0 0.0
    %634 = vmatprep.subr.mxu0 0.0
    %635 = vmatpush1.msra.mxu0 0.0
    %636 = vmatprep.subr.mxu0 0.0
    %637 = vmatpush1.msra.mxu0 0.0
    %638 = vmatprep.subr.mxu0 0.0
    %639 = vmatpush1.msra.mxu0 0.0
    %640 = vmatprep.subr.mxu0 0.0
    %641 = vmatpush1.msra.mxu0 0.0
    %642 = vmatprep.subr.mxu0 0.0
    %643 = vmatpush1.msra.mxu0 0.0
    %644 = vmatprep.subr.mxu0 0.0
    %645 = vmatpush1.msra.mxu0 0.0
    %646 = vmatprep.subr.mxu0 0.0
    %647 = vmatpush1.msra.mxu0 0.0
    %648 = vmatprep.subr.mxu0 0.0
    %649 = vmatpush1.msra.mxu0 0.0
    %650 = vmatprep.subr.mxu0 0.0
    %651 = vmatpush1.msra.mxu0 0.0
    %652 = vmatprep.subr.mxu0 0.0
    %653 = vmatpush1.msra.mxu0 0.0
    %654 = vmatprep.subr.mxu0 0.0
    %655 = vmatpush1.msra.mxu0 0.0
    %656 = vmatprep.subr.mxu0 0.0
    %657 = vmatpush1.msra.mxu0 0.0
    %658 = vmatprep.subr.mxu0 0.0
    %659 = vmatpush1.msra.mxu0 0.0
    %660 = vmatprep.subr.mxu0 0.0
    %661 = vmatpush1.msra.mxu0 0.0
    %662 = vmatprep.subr.mxu0 0.0
    %663 = vmatpush1.msra.mxu0 0.0
    %664 = vmatprep.subr.mxu0 0.0
    %665 = vmatpush1.msra.mxu0 0.0
    %666 = vmatprep.subr.mxu0 0.0
    %667 = vmatpush1.msra.mxu0 0.0
    %668 = vmatprep.subr.mxu0 0.0
    %669 = vmatpush1.msra.mxu0 0.0
    %670 = vmatprep.subr.mxu0 0.0
    %671 = vmatpush1.msra.mxu0 0.0
    %672 = vmatprep.subr.mxu0 0.0
    %673 = vmatpush1.msra.mxu0 0.0
    %674 = vmatprep.subr.mxu0 0.0
    %675 = vmatpush1.msra.mxu0 0.0
    %676 = vmatprep.subr.mxu0 0.0
    %677 = vmatpush1.msra.mxu0 0.0
    %678 = vmatprep.subr.mxu0 0.0
    %679 = vmatpush1.msra.mxu0 0.0
    %680 = vmatprep.subr.mxu0 0.0
    %681 = vmatpush1.msra.mxu0 0.0
    %682 = vmatprep.subr.mxu0 0.0
    %683 = vmatpush1.msra.mxu0 0.0
    %684 = vmatprep.mubr.f32.mxu0 0.0
    %685 = vmatmul.mubr.f32.gmra.mrb[0].mxu0 %v615
    %v686 = vpop.f32.mrb[0].mxu0
    %v687 = vadd.f32 0.0, %v686
    %v688 = vpop.f32.mrb[0].mxu0
    %689 = vmatprep.mubr.f32.mxu0 0.0
    %690 = vmatmul.mubr.f32.gmra.mrb[0].mxu0 %v618
    %v691 = vpop.f32.mrb[0].mxu0
    %v692 = vadd.f32 0.0, %v691
    %v693 = vpop.f32.mrb[0].mxu0
    %694 = vdwg.mxu0
    %v695 = vpack.c.bf16 %v692, %v687
    %vm696 = vcmp.lt.s32.totalorder %v40, 0
    %v697 = vsub.s32 0, %v40
    %v698 = vsel %vm696, %v697, %v40
    %v699 = vshrl.u32 %v698, 3
    %v700 = vand.u32 %v698, 7
    %v701 = vsub.s32 0, %v700
    %v702 = vsel %vm696, %v701, %v700
    %vm703 = vcmp.lt.s32.totalorder %v41, 0
    %v704 = vsub.s32 0, %v41
    %v705 = vsel %vm703, %v704, %v41
    %v706 = vshrl.u32 %v705, 3
    %v707 = vand.u32 %v705, 7
    %v708 = vsub.s32 0, %v707
    %v709 = vsel %vm703, %v708, %v707
    %vm710 = vcmp.ne.s32.totalorder %v702, 0
    %vm711 = vcmp.ne.s32.totalorder %v709, 0
    %vm712 = vcmp.lt.s32.totalorder %v702, 0
    %vm713 = vcmp.lt.s32.totalorder %v709, 0
    %vm714 = vmand %vm712, %vm710
    %vm715 = vmand %vm713, %vm711
    %v716 = vadd.s32 %v702, 8
    %v717 = vadd.s32 %v709, 8
    %v718 = vsel %vm714, %v716, %v702
    %v719 = vsel %vm715, %v717, %v709
    %vm720 = vcmp.eq.s32.totalorder %v718, 0
    %vm721 = vcmp.eq.s32.totalorder %v719, 0
    %v723 = vshrl.u32 %v695, 16
    %v725 = vrot.slane %v723, 7
    %v727 = vshll.u32 %v695, 16
    %v729 = vor.u32 %v725, %v727
    %v731 = vsel %vm116, %v725, %v729
    %vm732 = vmpackc.low %vm720, %vm720
    %vm733 = vmpackc.low %vm721, %vm721
    %v734 = vsel %vm732, 65537, 0
    %v735 = vsel %vm733, 65537, 0
    %v736 = vunpack.c.l.b16 %v734
    %v737 = vunpack.c.l.b16 %v735
    %v738 = vpack.c.b16 %v737, %v736
    %vm739 = vcmp.ne.s16.totalorder %v738, 0
    %v740 = vsel %vm739, 0, %v731
    %vm741 = vcmp.eq.s32.totalorder %v718, 7
    %vm742 = vcmp.eq.s32.totalorder %v719, 7
    %v743 = vrot.slane %v727, 1
    %v744 = vor.u32 %v723, %v743
    %v747 = vsel %vm150, %v744, %v743
    %vm748 = vmpackc.low %vm741, %vm741
    %vm749 = vmpackc.low %vm742, %vm742
    %v750 = vsel %vm748, 65537, 0
    %v751 = vsel %vm749, 65537, 0
    %v752 = vunpack.c.l.b16 %v750
    %v753 = vunpack.c.l.b16 %v751
    %v754 = vpack.c.b16 %v753, %v752
    %vm755 = vcmp.ne.s16.totalorder %v754, 0
    %v756 = vsel %vm755, 0, %v747
    %v757 = vld [vmem:[%s2] sm:$0xf]
    %v758 = vld [vmem:[%s2 + $0x4] sm:$0xf]
    %v759 = vld [vmem:[%s2 + $0x8] sm:$0xf]
    %v760 = vld [vmem:[%s2 + $0xc] sm:$0xf]
    %v761 = vld [vmem:[%s2 + $0x10] sm:$0xf]
    %v762 = vld [vmem:[%s2 + $0x14] sm:$0xf]
    %v763 = vld [vmem:[%s2 + $0x18] sm:$0xf]
    %v764 = vld [vmem:[%s2 + $0x1c] sm:$0xf]
    %v765 = vld [vmem:[%s2 + $0x20] sm:$0xf]
    %v766 = vld [vmem:[%s2 + $0x24] sm:$0xf]
    %v767 = vld [vmem:[%s2 + $0x28] sm:$0xf]
    %v768 = vld [vmem:[%s2 + $0x2c] sm:$0xf]
    %v769 = vld [vmem:[%s2 + $0x30] sm:$0xf]
    %v770 = vld [vmem:[%s2 + $0x34] sm:$0xf]
    %v771 = vld [vmem:[%s2 + $0x38] sm:$0xf]
    %v772 = vld [vmem:[%s2 + $0x3c] sm:$0xf]
    %v773 = vld [vmem:[%s2 + $0x40] sm:$0xf]
    %v774 = vld [vmem:[%s2 + $0x44] sm:$0xf]
    %v775 = vld [vmem:[%s2 + $0x48] sm:$0xf]
    %v776 = vld [vmem:[%s2 + $0x4c] sm:$0xf]
    %v777 = vld [vmem:[%s2 + $0x50] sm:$0xf]
    %v778 = vld [vmem:[%s2 + $0x54] sm:$0xf]
    %v779 = vld [vmem:[%s2 + $0x58] sm:$0xf]
    %v780 = vld [vmem:[%s2 + $0x5c] sm:$0xf]
    %v781 = vld [vmem:[%s2 + $0x60] sm:$0xf]
    %v782 = vld [vmem:[%s2 + $0x64] sm:$0xf]
    %v783 = vld [vmem:[%s2 + $0x68] sm:$0xf]
    %v784 = vld [vmem:[%s2 + $0x6c] sm:$0xf]
    %v785 = vld [vmem:[%s2 + $0x70] sm:$0xf]
    %v786 = vld [vmem:[%s2 + $0x74] sm:$0xf]
    %v787 = vld [vmem:[%s2 + $0x78] sm:$0xf]
    %v788 = vld [vmem:[%s2 + $0x7c] sm:$0xf]
    %v789 = vld [vmem:[%s2 + $0x80] sm:$0xf]
    %v790 = vld [vmem:[%s2 + $0x84] sm:$0xf]
    %v791 = vld [vmem:[%s2 + $0x88] sm:$0xf]
    %v792 = vld [vmem:[%s2 + $0x8c] sm:$0xf]
    %v793 = vld [vmem:[%s2 + $0x90] sm:$0xf]
    %v794 = vld [vmem:[%s2 + $0x94] sm:$0xf]
    %v795 = vld [vmem:[%s2 + $0x98] sm:$0xf]
    %v796 = vld [vmem:[%s2 + $0x9c] sm:$0xf]
    %v797 = vld [vmem:[%s2 + $0xa0] sm:$0xf]
    %v798 = vld [vmem:[%s2 + $0xa4] sm:$0xf]
    %v799 = vld [vmem:[%s2 + $0xa8] sm:$0xf]
    %v800 = vld [vmem:[%s2 + $0xac] sm:$0xf]
    %v801 = vld [vmem:[%s2 + $0xb0] sm:$0xf]
    %v802 = vld [vmem:[%s2 + $0xb4] sm:$0xf]
    %v803 = vld [vmem:[%s2 + $0xb8] sm:$0xf]
    %v804 = vld [vmem:[%s2 + $0xbc] sm:$0xf]
    %v853 = vunpack.c.l.b16 %v757
    %v854 = vunpack.c.l.b16 %v758
    %v855 = vunpack.c.l.b16 %v759
    %v856 = vunpack.c.l.b16 %v760
    %v857 = vunpack.c.l.b16 %v761
    %v858 = vunpack.c.l.b16 %v762
    %v859 = vunpack.c.l.b16 %v763
    %v860 = vunpack.c.l.b16 %v764
    %v861 = vunpack.c.l.b16 %v765
    %v862 = vunpack.c.l.b16 %v766
    %v863 = vunpack.c.l.b16 %v767
    %v864 = vunpack.c.l.b16 %v768
    %v865 = vunpack.c.l.b16 %v769
    %v866 = vunpack.c.l.b16 %v770
    %v867 = vunpack.c.l.b16 %v771
    %v868 = vunpack.c.l.b16 %v772
    %v869 = vunpack.c.l.b16 %v773
    %v870 = vunpack.c.l.b16 %v774
    %v871 = vunpack.c.l.b16 %v775
    %v872 = vunpack.c.l.b16 %v776
    %v873 = vunpack.c.l.b16 %v777
    %v874 = vunpack.c.l.b16 %v778
    %v875 = vunpack.c.l.b16 %v779
    %v876 = vunpack.c.l.b16 %v780
    %v877 = vunpack.c.l.b16 %v781
    %v878 = vunpack.c.l.b16 %v782
    %v879 = vunpack.c.l.b16 %v783
    %v880 = vunpack.c.l.b16 %v784
    %v881 = vunpack.c.l.b16 %v785
    %v882 = vunpack.c.l.b16 %v786
    %v883 = vunpack.c.l.b16 %v787
    %v884 = vunpack.c.l.b16 %v788
    %v885 = vunpack.c.l.b16 %v789
    %v886 = vunpack.c.l.b16 %v790
    %v887 = vunpack.c.l.b16 %v791
    %v888 = vunpack.c.l.b16 %v792
    %v889 = vunpack.c.l.b16 %v793
    %v890 = vunpack.c.l.b16 %v794
    %v891 = vunpack.c.l.b16 %v795
    %v892 = vunpack.c.l.b16 %v796
    %v893 = vunpack.c.l.b16 %v797
    %v894 = vunpack.c.l.b16 %v798
    %v895 = vunpack.c.l.b16 %v799
    %v896 = vunpack.c.l.b16 %v800
    %v897 = vunpack.c.l.b16 %v801
    %v898 = vunpack.c.l.b16 %v802
    %v899 = vunpack.c.l.b16 %v803
    %v900 = vunpack.c.l.b16 %v804
    %v901 = vpack.c.b16 %v854, %v853
    %v902 = vpack.c.b16 %v856, %v855
    %v903 = vpack.c.b16 %v858, %v857
    %v904 = vpack.c.b16 %v860, %v859
    %v905 = vpack.c.b16 %v862, %v861
    %v906 = vpack.c.b16 %v864, %v863
    %v907 = vpack.c.b16 %v866, %v865
    %v908 = vpack.c.b16 %v868, %v867
    %v909 = vpack.c.b16 %v870, %v869
    %v910 = vpack.c.b16 %v872, %v871
    %v911 = vpack.c.b16 %v874, %v873
    %v912 = vpack.c.b16 %v876, %v875
    %v913 = vpack.c.b16 %v878, %v877
    %v914 = vpack.c.b16 %v880, %v879
    %v915 = vpack.c.b16 %v882, %v881
    %v916 = vpack.c.b16 %v884, %v883
    %v917 = vpack.c.b16 %v886, %v885
    %v918 = vpack.c.b16 %v888, %v887
    %v919 = vpack.c.b16 %v890, %v889
    %v920 = vpack.c.b16 %v892, %v891
    %v921 = vpack.c.b16 %v894, %v893
    %v922 = vpack.c.b16 %v896, %v895
    %v923 = vpack.c.b16 %v898, %v897
    %v924 = vpack.c.b16 %v900, %v899
    %949 = vmatprep.subr.bf16.mxu0 0
    %950 = vmatpush1.bf16.msra.mxu0 %v901
    %951 = vmatprep.subr.bf16.mxu0 0
    %952 = vmatpush1.bf16.msra.mxu0 %v902
    %953 = vmatprep.subr.bf16.mxu0 0
    %954 = vmatpush1.bf16.msra.mxu0 %v903
    %955 = vmatprep.subr.bf16.mxu0 0
    %956 = vmatpush1.bf16.msra.mxu0 %v904
    %957 = vmatprep.subr.bf16.mxu0 0
    %958 = vmatpush1.bf16.msra.mxu0 %v905
    %959 = vmatprep.subr.bf16.mxu0 0
    %960 = vmatpush1.bf16.msra.mxu0 %v906
    %961 = vmatprep.subr.bf16.mxu0 0
    %962 = vmatpush1.bf16.msra.mxu0 %v907
    %963 = vmatprep.subr.bf16.mxu0 0
    %964 = vmatpush1.bf16.msra.mxu0 %v908
    %965 = vmatprep.subr.bf16.mxu0 0
    %966 = vmatpush1.bf16.msra.mxu0 %v909
    %967 = vmatprep.subr.bf16.mxu0 0
    %968 = vmatpush1.bf16.msra.mxu0 %v910
    %969 = vmatprep.subr.bf16.mxu0 0
    %970 = vmatpush1.bf16.msra.mxu0 %v911
    %971 = vmatprep.subr.bf16.mxu0 0
    %972 = vmatpush1.bf16.msra.mxu0 %v912
    %973 = vmatprep.subr.bf16.mxu0 0
    %974 = vmatpush1.bf16.msra.mxu0 %v913
    %975 = vmatprep.subr.bf16.mxu0 0
    %976 = vmatpush1.bf16.msra.mxu0 %v914
    %977 = vmatprep.subr.bf16.mxu0 0
    %978 = vmatpush1.bf16.msra.mxu0 %v915
    %979 = vmatprep.subr.bf16.mxu0 0
    %980 = vmatpush1.bf16.msra.mxu0 %v916
    %981 = vmatprep.mubr.bf16.mxu0 %v695
    %982 = vmatmul.mubr.bf16.gmra.mrb[0].mxu0 %v740
    %v983 = vpop.f32.mrb[0].mxu0
    %v984 = vadd.f32 0.0, %v983
    %v985 = vpop.f32.mrb[0].mxu0
    %v986 = vpop.f32.mrb[0].mxu0
    %v987 = vadd.f32 0.0, %v986
    %v988 = vpop.f32.mrb[0].mxu0
    %989 = vdwg.mxu0
    %990 = vmatprep.subr.bf16.mxu0 0
    %991 = vmatpush1.bf16.msra.mxu0 %v917
    %992 = vmatprep.subr.bf16.mxu0 0
    %993 = vmatpush1.bf16.msra.mxu0 %v918
    %994 = vmatprep.subr.bf16.mxu0 0
    %995 = vmatpush1.bf16.msra.mxu0 %v919
    %996 = vmatprep.subr.bf16.mxu0 0
    %997 = vmatpush1.bf16.msra.mxu0 %v920
    %998 = vmatprep.subr.bf16.mxu0 0
    %999 = vmatpush1.bf16.msra.mxu0 %v921
    %1000 = vmatprep.subr.bf16.mxu0 0
    %1001 = vmatpush1.bf16.msra.mxu0 %v922
    %1002 = vmatprep.subr.bf16.mxu0 0
    %1003 = vmatpush1.bf16.msra.mxu0 %v923
    %1004 = vmatprep.subr.bf16.mxu0 0
    %1005 = vmatpush1.bf16.msra.mxu0 %v924
    %1006 = vmatprep.subr.bf16.mxu0 0
    %1007 = vmatpush1.bf16.msra.mxu0 0
    %1008 = vmatprep.subr.bf16.mxu0 0
    %1009 = vmatpush1.bf16.msra.mxu0 0
    %1010 = vmatprep.subr.bf16.mxu0 0
    %1011 = vmatpush1.bf16.msra.mxu0 0
    %1012 = vmatprep.subr.bf16.mxu0 0
    %1013 = vmatpush1.bf16.msra.mxu0 0
    %1014 = vmatprep.subr.bf16.mxu0 0
    %1015 = vmatpush1.bf16.msra.mxu0 0
    %1016 = vmatprep.subr.bf16.mxu0 0
    %1017 = vmatpush1.bf16.msra.mxu0 0
    %1018 = vmatprep.subr.bf16.mxu0 0
    %1019 = vmatpush1.bf16.msra.mxu0 0
    %1020 = vmatprep.subr.bf16.mxu0 0
    %1021 = vmatpush1.bf16.msra.mxu0 0
    %1022 = vmatprep.mubr.bf16.mxu0 0
    %1023 = vmatmul.mubr.bf16.gmra.mrb[0].mxu0 %v756
    %v1024 = vpop.f32.mrb[0].mxu0
    %v1025 = vadd.f32 %v984, %v1024
    %v1026 = vpop.f32.mrb[0].mxu0
    %v1027 = vpop.f32.mrb[0].mxu0
    %v1028 = vadd.f32 %v987, %v1027
    %v1029 = vpop.f32.mrb[0].mxu0
    %1030 = vdwg.mxu0
    %v1031 = vsel %vm176, %v1025, 0.0
    %v1032 = vsel %vm176, %v1028, 0.0
    %v1033 = vadd.f32 %v1031, %v1032
    %v1034 = vrot.slane %v1033, 4
    %v1035 = vadd.f32 %v1033, %v1034
    %v1036 = vrot.slane %v1035, 2
    %v1037 = vadd.f32 %v1035, %v1036
    %v1038 = vrot.slane %v1037, 1
    %v1039 = vadd.f32 %v1037, %v1038
    %v1040 = vmul.f32 %v1025, %v1025
    %v1041 = vmul.f32 %v1028, %v1028
    %v1042 = vsel %vm176, %v1040, 0.0
    %v1043 = vsel %vm176, %v1041, 0.0
    %v1044 = vadd.f32 %v1042, %v1043
    %v1045 = vrot.slane %v1044, 4
    %v1046 = vadd.f32 %v1044, %v1045
    %v1047 = vrot.slane %v1046, 2
    %v1048 = vadd.f32 %v1046, %v1047
    %v1049 = vrot.slane %v1048, 1
    %v1050 = vadd.f32 %v1048, %v1049
    %v1051 = vsel %vm358, %v1039, %v1050
    %v1052 = vld [vmem:[%s6] sm:$0xff]
    %v1053 = vld [vmem:[%s6 + $0x8] sm:$0xff]
    %v1054 = vld [vmem:[%s6 + $0x10] sm:$0xff]
    %v1055 = vld [vmem:[%s6 + $0x18] sm:$0xff]
    %v1056 = vld [vmem:[%s6 + $0x20] sm:$0xff]
    %v1057 = vld [vmem:[%s6 + $0x28] sm:$0xff]
    %v1058 = vld [vmem:[%s6 + $0x30] sm:$0xff]
    %v1059 = vld [vmem:[%s6 + $0x38] sm:$0xff]
    %v1061 = vsel %vm176, %v1051, 0
    %1063 = vmatprep.subr.mxu0 0.0
    %1064 = vmatpush1.msra.mxu0 %v1052
    %1065 = vmatprep.subr.mxu0 0.0
    %1066 = vmatpush1.msra.mxu0 %v1053
    %1067 = vmatprep.subr.mxu0 0.0
    %1068 = vmatpush1.msra.mxu0 %v1054
    %1069 = vmatprep.subr.mxu0 0.0
    %1070 = vmatpush1.msra.mxu0 %v1055
    %1071 = vmatprep.subr.mxu0 0.0
    %1072 = vmatpush1.msra.mxu0 %v1056
    %1073 = vmatprep.subr.mxu0 0.0
    %1074 = vmatpush1.msra.mxu0 %v1057
    %1075 = vmatprep.subr.mxu0 0.0
    %1076 = vmatpush1.msra.mxu0 %v1058
    %1077 = vmatprep.subr.mxu0 0.0
    %1078 = vmatpush1.msra.mxu0 %v1059
    %1079 = vmatprep.subr.mxu0 0.0
    %1080 = vmatpush1.msra.mxu0 0.0
    %1081 = vmatprep.subr.mxu0 0.0
    %1082 = vmatpush1.msra.mxu0 0.0
    %1083 = vmatprep.subr.mxu0 0.0
    %1084 = vmatpush1.msra.mxu0 0.0
    %1085 = vmatprep.subr.mxu0 0.0
    %1086 = vmatpush1.msra.mxu0 0.0
    %1087 = vmatprep.subr.mxu0 0.0
    %1088 = vmatpush1.msra.mxu0 0.0
    %1089 = vmatprep.subr.mxu0 0.0
    %1090 = vmatpush1.msra.mxu0 0.0
    %1091 = vmatprep.subr.mxu0 0.0
    %1092 = vmatpush1.msra.mxu0 0.0
    %1093 = vmatprep.subr.mxu0 0.0
    %1094 = vmatpush1.msra.mxu0 0.0
    %1095 = vmatprep.subr.mxu0 0.0
    %1096 = vmatpush1.msra.mxu0 0.0
    %1097 = vmatprep.subr.mxu0 0.0
    %1098 = vmatpush1.msra.mxu0 0.0
    %1099 = vmatprep.subr.mxu0 0.0
    %1100 = vmatpush1.msra.mxu0 0.0
    %1101 = vmatprep.subr.mxu0 0.0
    %1102 = vmatpush1.msra.mxu0 0.0
    %1103 = vmatprep.subr.mxu0 0.0
    %1104 = vmatpush1.msra.mxu0 0.0
    %1105 = vmatprep.subr.mxu0 0.0
    %1106 = vmatpush1.msra.mxu0 0.0
    %1107 = vmatprep.subr.mxu0 0.0
    %1108 = vmatpush1.msra.mxu0 0.0
    %1109 = vmatprep.subr.mxu0 0.0
    %1110 = vmatpush1.msra.mxu0 0.0
    %1111 = vmatprep.subr.mxu0 0.0
    %1112 = vmatpush1.msra.mxu0 0.0
    %1113 = vmatprep.subr.mxu0 0.0
    %1114 = vmatpush1.msra.mxu0 0.0
    %1115 = vmatprep.subr.mxu0 0.0
    %1116 = vmatpush1.msra.mxu0 0.0
    %1117 = vmatprep.subr.mxu0 0.0
    %1118 = vmatpush1.msra.mxu0 0.0
    %1119 = vmatprep.subr.mxu0 0.0
    %1120 = vmatpush1.msra.mxu0 0.0
    %1121 = vmatprep.subr.mxu0 0.0
    %1122 = vmatpush1.msra.mxu0 0.0
    %1123 = vmatprep.subr.mxu0 0.0
    %1124 = vmatpush1.msra.mxu0 0.0
    %1125 = vmatprep.subr.mxu0 0.0
    %1126 = vmatpush1.msra.mxu0 0.0
    %1127 = vmatprep.mubr.f32.mxu0 0.0
    %1128 = vmatmul.mubr.f32.gmra.mrb[0].mxu0 %v1061
    %v1129 = vpop.f32.mrb[0].mxu0
    %v1130 = vadd.f32 0.0, %v1129
    %v1131 = vpop.f32.mrb[0].mxu0
    %1132 = vdwg.mxu0
    %v1133 = vmul.f32 %v1130, 0.0078125
    %v1134 = vmul.f32 %v1133, %v1133
    %v1136 = vrot.slane %v1134, 7
    %v1138 = vsub.f32 %v1133, %v1136
    %v1139 = vmax.f32 %v1138, 0.0
    %s1140 = scalar_lea.vmem %s5, 2
    %v1141 = vld [vmem:[%s1140] sm:$0x3]
    %v1142 = vadd.f32 %v1139, 1e-05
    %v1143 = vrsqrt.pop %v1142
    %v1145 = vrot.slane %v1143, 1
    %v1147 = vmul.f32 %v1141, %v1145
    %v1148 = vmul.f32 %v1133, %v1147
    %v1150 = vrot.slane %v1148, 7
    %v1152 = vsub.f32 %v1141, %v1150
    %v1153 = vsel %vm358, %v1147, %v1152
    %v1155 = vsel %vm467, %v1153, 0
    %1157 = vmatprep.subr.mxu0 0.0
    %1158 = vmatpush1.msra.mxu0 %v466
    %1159 = vmatprep.subr.mxu0 0.0
    %1160 = vmatpush1.msra.mxu0 0.0
    %1161 = vmatprep.subr.mxu0 0.0
    %1162 = vmatpush1.msra.mxu0 0.0
    %1163 = vmatprep.subr.mxu0 0.0
    %1164 = vmatpush1.msra.mxu0 0.0
    %1165 = vmatprep.subr.mxu0 0.0
    %1166 = vmatpush1.msra.mxu0 0.0
    %1167 = vmatprep.subr.mxu0 0.0
    %1168 = vmatpush1.msra.mxu0 0.0
    %1169 = vmatprep.subr.mxu0 0.0
    %1170 = vmatpush1.msra.mxu0 0.0
    %1171 = vmatprep.subr.mxu0 0.0
    %1172 = vmatpush1.msra.mxu0 0.0
    %1173 = vmatprep.subr.mxu0 0.0
    %1174 = vmatpush1.msra.mxu0 0.0
    %1175 = vmatprep.subr.mxu0 0.0
    %1176 = vmatpush1.msra.mxu0 0.0
    %1177 = vmatprep.subr.mxu0 0.0
    %1178 = vmatpush1.msra.mxu0 0.0
    %1179 = vmatprep.subr.mxu0 0.0
    %1180 = vmatpush1.msra.mxu0 0.0
    %1181 = vmatprep.subr.mxu0 0.0
    %1182 = vmatpush1.msra.mxu0 0.0
    %1183 = vmatprep.subr.mxu0 0.0
    %1184 = vmatpush1.msra.mxu0 0.0
    %1185 = vmatprep.subr.mxu0 0.0
    %1186 = vmatpush1.msra.mxu0 0.0
    %1187 = vmatprep.subr.mxu0 0.0
    %1188 = vmatpush1.msra.mxu0 0.0
    %1189 = vmatprep.subr.mxu0 0.0
    %1190 = vmatpush1.msra.mxu0 0.0
    %1191 = vmatprep.subr.mxu0 0.0
    %1192 = vmatpush1.msra.mxu0 0.0
    %1193 = vmatprep.subr.mxu0 0.0
    %1194 = vmatpush1.msra.mxu0 0.0
    %1195 = vmatprep.subr.mxu0 0.0
    %1196 = vmatpush1.msra.mxu0 0.0
    %1197 = vmatprep.subr.mxu0 0.0
    %1198 = vmatpush1.msra.mxu0 0.0
    %1199 = vmatprep.subr.mxu0 0.0
    %1200 = vmatpush1.msra.mxu0 0.0
    %1201 = vmatprep.subr.mxu0 0.0
    %1202 = vmatpush1.msra.mxu0 0.0
    %1203 = vmatprep.subr.mxu0 0.0
    %1204 = vmatpush1.msra.mxu0 0.0
    %1205 = vmatprep.subr.mxu0 0.0
    %1206 = vmatpush1.msra.mxu0 0.0
    %1207 = vmatprep.subr.mxu0 0.0
    %1208 = vmatpush1.msra.mxu0 0.0
    %1209 = vmatprep.subr.mxu0 0.0
    %1210 = vmatpush1.msra.mxu0 0.0
    %1211 = vmatprep.subr.mxu0 0.0
    %1212 = vmatpush1.msra.mxu0 0.0
    %1213 = vmatprep.subr.mxu0 0.0
    %1214 = vmatpush1.msra.mxu0 0.0
    %1215 = vmatprep.subr.mxu0 0.0
    %1216 = vmatpush1.msra.mxu0 0.0
    %1217 = vmatprep.subr.mxu0 0.0
    %1218 = vmatpush1.msra.mxu0 0.0
    %1219 = vmatprep.subr.mxu0 0.0
    %1220 = vmatpush1.msra.mxu0 0.0
    %1221 = vmatprep.mubr.f32.mxu0 0.0
    %1222 = vmatmul.mubr.f32.gmra.mrb[0].mxu0 %v1155
    %v1223 = vpop.f32.mrb[0].mxu0
    %v1224 = vadd.f32 0.0, %v1223
    %v1225 = vpop.f32.mrb[0].mxu0
    %1226 = vdwg.mxu0
    %v1227 = vlaneseq
    %v1228 = vshrl.u32 %v1227, 7
    %v1229 = vsub.s32 0, %v1228
    %v1230 = vrot.slane %v1224, %v1229
    %v1231 = vmul.f32 %v1025, %v1230
    %v1232 = vmul.f32 %v1028, %v1230
    %v1233 = vlaneseq
    %v1234 = vshrl.u32 %v1233, 7
    %v1235 = vsub.s32 1, %v1234
    %v1236 = vrot.slane %v1224, %v1235
    %v1237 = vadd.f32 %v1231, %v1236
    %v1238 = vadd.f32 %v1232, %v1236
    %v1239 = vmax.f32 %v1237, 0.0
    %v1240 = vmax.f32 %v1238, 0.0
    %1243 = vrot.lane.b32.xlu0 %v1239, 120
    %v1244 = vpop.permute.xlu0 %1243
    %1245 = vrot.lane.b32.xlu0 %v1240, 120
    %v1246 = vpop.permute.xlu0 %1245
    %1249 = vrot.lane.b32.xlu0 %v1239, 56
    %v1250 = vpop.permute.xlu0 %1249
    %1251 = vrot.lane.b32.xlu0 %v1240, 56
    %v1252 = vpop.permute.xlu0 %1251
    %vm1255 = vcmask 457728
    %v1256 = vsel %vm1255, %v1244, %v1250
    %v1257 = vsel %vm1255, %v1246, %v1252
    %v1258 = vmax.f32 %v1239, %v1256
    %v1259 = vmax.f32 %v1240, %v1257
    %v1262 = vrot.slane %v1258, 1
    %v1263 = vrot.slane %v1259, 1
    %v1264 = vsel %vm585, %v1262, %v1263
    %v1268 = vsel %vm585, %v1263, %v1262
    %v1269 = vmax.f32 %v1258, %v1264
    %v1270 = vmax.f32 %v1259, %v1268
    %vm1271 = vcmask 130048
    %v1272 = vsel %vm1271, %v611, 0
    %1274 = vmatprep.subr.mxu0 0.0
    %1275 = vmatpush1.msra.mxu0 %v1269
    %1276 = vmatprep.subr.mxu0 0.0
    %1277 = vmatpush1.msra.mxu0 %v1270
    %1278 = vmatprep.subr.mxu0 0.0
    %1279 = vmatpush1.msra.mxu0 0.0
    %1280 = vmatprep.subr.mxu0 0.0
    %1281 = vmatpush1.msra.mxu0 0.0
    %1282 = vmatprep.subr.mxu0 0.0
    %1283 = vmatpush1.msra.mxu0 0.0
    %1284 = vmatprep.subr.mxu0 0.0
    %1285 = vmatpush1.msra.mxu0 0.0
    %1286 = vmatprep.subr.mxu0 0.0
    %1287 = vmatpush1.msra.mxu0 0.0
    %1288 = vmatprep.subr.mxu0 0.0
    %1289 = vmatpush1.msra.mxu0 0.0
    %1290 = vmatprep.subr.mxu0 0.0
    %1291 = vmatpush1.msra.mxu0 0.0
    %1292 = vmatprep.subr.mxu0 0.0
    %1293 = vmatpush1.msra.mxu0 0.0
    %1294 = vmatprep.subr.mxu0 0.0
    %1295 = vmatpush1.msra.mxu0 0.0
    %1296 = vmatprep.subr.mxu0 0.0
    %1297 = vmatpush1.msra.mxu0 0.0
    %1298 = vmatprep.subr.mxu0 0.0
    %1299 = vmatpush1.msra.mxu0 0.0
    %1300 = vmatprep.subr.mxu0 0.0
    %1301 = vmatpush1.msra.mxu0 0.0
    %1302 = vmatprep.subr.mxu0 0.0
    %1303 = vmatpush1.msra.mxu0 0.0
    %1304 = vmatprep.subr.mxu0 0.0
    %1305 = vmatpush1.msra.mxu0 0.0
    %1306 = vmatprep.subr.mxu0 0.0
    %1307 = vmatpush1.msra.mxu0 0.0
    %1308 = vmatprep.subr.mxu0 0.0
    %1309 = vmatpush1.msra.mxu0 0.0
    %1310 = vmatprep.subr.mxu0 0.0
    %1311 = vmatpush1.msra.mxu0 0.0
    %1312 = vmatprep.subr.mxu0 0.0
    %1313 = vmatpush1.msra.mxu0 0.0
    %1314 = vmatprep.subr.mxu0 0.0
    %1315 = vmatpush1.msra.mxu0 0.0
    %1316 = vmatprep.subr.mxu0 0.0
    %1317 = vmatpush1.msra.mxu0 0.0
    %1318 = vmatprep.subr.mxu0 0.0
    %1319 = vmatpush1.msra.mxu0 0.0
    %1320 = vmatprep.subr.mxu0 0.0
    %1321 = vmatpush1.msra.mxu0 0.0
    %1322 = vmatprep.subr.mxu0 0.0
    %1323 = vmatpush1.msra.mxu0 0.0
    %1324 = vmatprep.subr.mxu0 0.0
    %1325 = vmatpush1.msra.mxu0 0.0
    %1326 = vmatprep.subr.mxu0 0.0
    %1327 = vmatpush1.msra.mxu0 0.0
    %1328 = vmatprep.subr.mxu0 0.0
    %1329 = vmatpush1.msra.mxu0 0.0
    %1330 = vmatprep.subr.mxu0 0.0
    %1331 = vmatpush1.msra.mxu0 0.0
    %1332 = vmatprep.subr.mxu0 0.0
    %1333 = vmatpush1.msra.mxu0 0.0
    %1334 = vmatprep.subr.mxu0 0.0
    %1335 = vmatpush1.msra.mxu0 0.0
    %1336 = vmatprep.subr.mxu0 0.0
    %1337 = vmatpush1.msra.mxu0 0.0
    %1338 = vmatprep.mubr.f32.mxu0 0.0
    %1339 = vmatmul.mubr.f32.gmra.mrb[0].mxu0 %v1272
    %v1340 = vpop.f32.mrb[0].mxu0
    %v1341 = vadd.f32 0.0, %v1340
    %v1342 = vpop.f32.mrb[0].mxu0
    %1343 = vdwg.mxu0
    %v1344 = vpack.c.bf16 %v1341, %v1341
    %vm1345 = vcmp.lt.s32.totalorder %v40, 0
    %v1346 = vsub.s32 0, %v40
    %v1347 = vsel %vm1345, %v1346, %v40
    %v1348 = vshrl.u32 %v1347, 2
    %v1349 = vand.u32 %v1347, 3
    %v1350 = vsub.s32 0, %v1349
    %v1351 = vsel %vm1345, %v1350, %v1349
    %vm1352 = vcmp.ne.s32.totalorder %v1351, 0
    %vm1353 = vcmp.lt.s32.totalorder %v1351, 0
    %vm1354 = vmand %vm1353, %vm1352
    %v1355 = vadd.s32 %v1351, 4
    %v1356 = vsel %vm1354, %v1355, %v1351
    %vm1357 = vcmp.eq.s32.totalorder %v1356, 0
    %v1359 = vshrl.u32 %v1344, 16
    %v1361 = vrot.slane %v1359, 3
    %v1363 = vrot.slane %v1359, 7
    %v1364 = vshll.u32 %v1344, 16
    %v1366 = vor.u32 %v1363, %v1364
    %v1368 = vsel %vm116, %v1361, %v1366
    %vm1369 = vmpackc.low %vm1357, %vm1357
    %v1370 = vsel %vm1369, 0, %v1368
    %vm1371 = vcmp.eq.s32.totalorder %v1356, 3
    %v1372 = vrot.slane %v1364, 1
    %v1373 = vor.u32 %v1359, %v1372
    %v1375 = vrot.slane %v1364, 5
    %vm1377 = vcmask 1043456
    %vm1378 = vsmask.f32 3328
    %vm1379 = vmand %vm1377, %vm1378
    %v1380 = vsel %vm1379, %v1373, %v1375
    %vm1381 = vmpackc.low %vm1371, %vm1371
    %v1382 = vsel %vm1381, 0, %v1380
    %1384 = vrot.lane.b32.xlu0 %v1344, 64
    %v1385 = vpop.permute.xlu0 %1384
    %v1388 = vsel %vm176, %v1370, %v1385
    %v1390 = vld [vmem:[%s3] sm:$0xf]
    %v1391 = vld [vmem:[%s3 + $0x4] sm:$0xf]
    %v1392 = vld [vmem:[%s3 + $0x8] sm:$0xf]
    %v1393 = vld [vmem:[%s3 + $0xc] sm:$0xf]
    %v1394 = vld [vmem:[%s3 + $0x10] sm:$0xf]
    %v1395 = vld [vmem:[%s3 + $0x14] sm:$0xf]
    %v1396 = vld [vmem:[%s3 + $0x18] sm:$0xf]
    %v1397 = vld [vmem:[%s3 + $0x1c] sm:$0xf]
    %v1398 = vld [vmem:[%s3 + $0x20] sm:$0xf]
    %v1399 = vld [vmem:[%s3 + $0x24] sm:$0xf]
    %v1400 = vld [vmem:[%s3 + $0x28] sm:$0xf]
    %v1401 = vld [vmem:[%s3 + $0x2c] sm:$0xf]
    %v1402 = vld [vmem:[%s3 + $0x30] sm:$0xf]
    %v1403 = vld [vmem:[%s3 + $0x34] sm:$0xf]
    %v1404 = vld [vmem:[%s3 + $0x38] sm:$0xf]
    %v1405 = vld [vmem:[%s3 + $0x3c] sm:$0xf]
    %v1406 = vld [vmem:[%s3 + $0x40] sm:$0xf]
    %v1407 = vld [vmem:[%s3 + $0x44] sm:$0xf]
    %v1408 = vld [vmem:[%s3 + $0x48] sm:$0xf]
    %v1409 = vld [vmem:[%s3 + $0x4c] sm:$0xf]
    %v1410 = vld [vmem:[%s3 + $0x50] sm:$0xf]
    %v1411 = vld [vmem:[%s3 + $0x54] sm:$0xf]
    %v1412 = vld [vmem:[%s3 + $0x58] sm:$0xf]
    %v1413 = vld [vmem:[%s3 + $0x5c] sm:$0xf]
    %v1438 = vunpack.c.l.b16 %v1390
    %v1439 = vunpack.c.l.b16 %v1391
    %v1440 = vunpack.c.l.b16 %v1392
    %v1441 = vunpack.c.l.b16 %v1393
    %v1442 = vunpack.c.l.b16 %v1394
    %v1443 = vunpack.c.l.b16 %v1395
    %v1444 = vunpack.c.l.b16 %v1396
    %v1445 = vunpack.c.l.b16 %v1397
    %v1446 = vunpack.c.l.b16 %v1398
    %v1447 = vunpack.c.l.b16 %v1399
    %v1448 = vunpack.c.l.b16 %v1400
    %v1449 = vunpack.c.l.b16 %v1401
    %v1450 = vunpack.c.l.b16 %v1402
    %v1451 = vunpack.c.l.b16 %v1403
    %v1452 = vunpack.c.l.b16 %v1404
    %v1453 = vunpack.c.l.b16 %v1405
    %v1454 = vunpack.c.l.b16 %v1406
    %v1455 = vunpack.c.l.b16 %v1407
    %v1456 = vunpack.c.l.b16 %v1408
    %v1457 = vunpack.c.l.b16 %v1409
    %v1458 = vunpack.c.l.b16 %v1410
    %v1459 = vunpack.c.l.b16 %v1411
    %v1460 = vunpack.c.l.b16 %v1412
    %v1461 = vunpack.c.l.b16 %v1413
    %v1462 = vpack.c.b16 %v1439, %v1438
    %v1463 = vpack.c.b16 %v1441, %v1440
    %v1464 = vpack.c.b16 %v1443, %v1442
    %v1465 = vpack.c.b16 %v1445, %v1444
    %v1466 = vpack.c.b16 %v1447, %v1446
    %v1467 = vpack.c.b16 %v1449, %v1448
    %v1468 = vpack.c.b16 %v1451, %v1450
    %v1469 = vpack.c.b16 %v1453, %v1452
    %v1470 = vpack.c.b16 %v1455, %v1454
    %v1471 = vpack.c.b16 %v1457, %v1456
    %v1472 = vpack.c.b16 %v1459, %v1458
    %v1473 = vpack.c.b16 %v1461, %v1460
    %v1487 = vsel %vm176, %v1382, 0
    %1489 = vmatprep.subr.bf16.mxu0 0
    %1490 = vmatpush1.bf16.msra.mxu0 %v1462
    %1491 = vmatprep.subr.bf16.mxu0 0
    %1492 = vmatpush1.bf16.msra.mxu0 %v1463
    %1493 = vmatprep.subr.bf16.mxu0 0
    %1494 = vmatpush1.bf16.msra.mxu0 %v1464
    %1495 = vmatprep.subr.bf16.mxu0 0
    %1496 = vmatpush1.bf16.msra.mxu0 %v1465
    %1497 = vmatprep.subr.bf16.mxu0 0
    %1498 = vmatpush1.bf16.msra.mxu0 %v1466
    %1499 = vmatprep.subr.bf16.mxu0 0
    %1500 = vmatpush1.bf16.msra.mxu0 %v1467
    %1501 = vmatprep.subr.bf16.mxu0 0
    %1502 = vmatpush1.bf16.msra.mxu0 %v1468
    %1503 = vmatprep.subr.bf16.mxu0 0
    %1504 = vmatpush1.bf16.msra.mxu0 %v1469
    %1505 = vmatprep.subr.bf16.mxu0 0
    %1506 = vmatpush1.bf16.msra.mxu0 %v1470
    %1507 = vmatprep.subr.bf16.mxu0 0
    %1508 = vmatpush1.bf16.msra.mxu0 %v1471
    %1509 = vmatprep.subr.bf16.mxu0 0
    %1510 = vmatpush1.bf16.msra.mxu0 %v1472
    %1511 = vmatprep.subr.bf16.mxu0 0
    %1512 = vmatpush1.bf16.msra.mxu0 %v1473
    %1513 = vmatprep.subr.bf16.mxu0 0
    %1514 = vmatpush1.bf16.msra.mxu0 0
    %1515 = vmatprep.subr.bf16.mxu0 0
    %1516 = vmatpush1.bf16.msra.mxu0 0
    %1517 = vmatprep.subr.bf16.mxu0 0
    %1518 = vmatpush1.bf16.msra.mxu0 0
    %1519 = vmatprep.subr.bf16.mxu0 0
    %1520 = vmatpush1.bf16.msra.mxu0 0
    %1521 = vmatprep.mubr.bf16.mxu0 %v1487
    %1522 = vmatmul.mubr.bf16.gmra.mrb[0].mxu0 %v1388
    %v1523 = vpop.f32.mrb[0].mxu0
    %v1524 = vadd.f32 0.0, %v1523
    %v1525 = vpop.f32.mrb[0].mxu0
    %v1526 = vpop.f32.mrb[0].mxu0
    %v1527 = vpop.f32.mrb[0].mxu0
    %1528 = vdwg.mxu0
    %v1529 = vsel %vm613, %v1524, 0.0
    %v1530 = vrot.slane %v1529, 4
    %v1531 = vadd.f32 %v1529, %v1530
    %v1532 = vrot.slane %v1531, 2
    %v1533 = vadd.f32 %v1531, %v1532
    %v1534 = vrot.slane %v1533, 1
    %v1535 = vadd.f32 %v1533, %v1534
    %v1536 = vmul.f32 %v1524, %v1524
    %v1537 = vsel %vm613, %v1536, 0.0
    %v1538 = vrot.slane %v1537, 4
    %v1539 = vadd.f32 %v1537, %v1538
    %v1540 = vrot.slane %v1539, 2
    %v1541 = vadd.f32 %v1539, %v1540
    %v1542 = vrot.slane %v1541, 1
    %v1543 = vadd.f32 %v1541, %v1542
    %v1544 = vsel %vm358, %v1535, %v1543
    %v1545 = vld [vmem:[%s6] sm:$0xff]
    %v1546 = vld [vmem:[%s6 + $0x8] sm:$0xff]
    %v1547 = vld [vmem:[%s6 + $0x10] sm:$0xff]
    %v1548 = vld [vmem:[%s6 + $0x18] sm:$0xff]
    %v1550 = vsel %vm613, %v1544, 0
    %1552 = vmatprep.subr.mxu0 0.0
    %1553 = vmatpush1.msra.mxu0 %v1545
    %1554 = vmatprep.subr.mxu0 0.0
    %1555 = vmatpush1.msra.mxu0 %v1546
    %1556 = vmatprep.subr.mxu0 0.0
    %1557 = vmatpush1.msra.mxu0 %v1547
    %1558 = vmatprep.subr.mxu0 0.0
    %1559 = vmatpush1.msra.mxu0 %v1548
    %1560 = vmatprep.subr.mxu0 0.0
    %1561 = vmatpush1.msra.mxu0 0.0
    %1562 = vmatprep.subr.mxu0 0.0
    %1563 = vmatpush1.msra.mxu0 0.0
    %1564 = vmatprep.subr.mxu0 0.0
    %1565 = vmatpush1.msra.mxu0 0.0
    %1566 = vmatprep.subr.mxu0 0.0
    %1567 = vmatpush1.msra.mxu0 0.0
    %1568 = vmatprep.subr.mxu0 0.0
    %1569 = vmatpush1.msra.mxu0 0.0
    %1570 = vmatprep.subr.mxu0 0.0
    %1571 = vmatpush1.msra.mxu0 0.0
    %1572 = vmatprep.subr.mxu0 0.0
    %1573 = vmatpush1.msra.mxu0 0.0
    %1574 = vmatprep.subr.mxu0 0.0
    %1575 = vmatpush1.msra.mxu0 0.0
    %1576 = vmatprep.subr.mxu0 0.0
    %1577 = vmatpush1.msra.mxu0 0.0
    %1578 = vmatprep.subr.mxu0 0.0
    %1579 = vmatpush1.msra.mxu0 0.0
    %1580 = vmatprep.subr.mxu0 0.0
    %1581 = vmatpush1.msra.mxu0 0.0
    %1582 = vmatprep.subr.mxu0 0.0
    %1583 = vmatpush1.msra.mxu0 0.0
    %1584 = vmatprep.subr.mxu0 0.0
    %1585 = vmatpush1.msra.mxu0 0.0
    %1586 = vmatprep.subr.mxu0 0.0
    %1587 = vmatpush1.msra.mxu0 0.0
    %1588 = vmatprep.subr.mxu0 0.0
    %1589 = vmatpush1.msra.mxu0 0.0
    %1590 = vmatprep.subr.mxu0 0.0
    %1591 = vmatpush1.msra.mxu0 0.0
    %1592 = vmatprep.subr.mxu0 0.0
    %1593 = vmatpush1.msra.mxu0 0.0
    %1594 = vmatprep.subr.mxu0 0.0
    %1595 = vmatpush1.msra.mxu0 0.0
    %1596 = vmatprep.subr.mxu0 0.0
    %1597 = vmatpush1.msra.mxu0 0.0
    %1598 = vmatprep.subr.mxu0 0.0
    %1599 = vmatpush1.msra.mxu0 0.0
    %1600 = vmatprep.subr.mxu0 0.0
    %1601 = vmatpush1.msra.mxu0 0.0
    %1602 = vmatprep.subr.mxu0 0.0
    %1603 = vmatpush1.msra.mxu0 0.0
    %1604 = vmatprep.subr.mxu0 0.0
    %1605 = vmatpush1.msra.mxu0 0.0
    %1606 = vmatprep.subr.mxu0 0.0
    %1607 = vmatpush1.msra.mxu0 0.0
    %1608 = vmatprep.subr.mxu0 0.0
    %1609 = vmatpush1.msra.mxu0 0.0
    %1610 = vmatprep.subr.mxu0 0.0
    %1611 = vmatpush1.msra.mxu0 0.0
    %1612 = vmatprep.subr.mxu0 0.0
    %1613 = vmatpush1.msra.mxu0 0.0
    %1614 = vmatprep.subr.mxu0 0.0
    %1615 = vmatpush1.msra.mxu0 0.0
    %1616 = vmatprep.mubr.f32.mxu0 0.0
    %1617 = vmatmul.mubr.f32.gmra.mrb[0].mxu0 %v1550
    %v1618 = vpop.f32.mrb[0].mxu0
    %v1619 = vadd.f32 0.0, %v1618
    %v1620 = vpop.f32.mrb[0].mxu0
    %1621 = vdwg.mxu0
    %v1622 = vmul.f32 %v1619, 0.03125
    %v1623 = vmul.f32 %v1622, %v1622
    %v1625 = vrot.slane %v1623, 7
    %v1627 = vsub.f32 %v1622, %v1625
    %v1628 = vmax.f32 %v1627, 0.0
    %s1629 = scalar_lea.vmem %s5, 4
    %v1630 = vld [vmem:[%s1629] sm:$0x3]
    %v1631 = vadd.f32 %v1628, 1e-05
    %v1632 = vrsqrt.pop %v1631
    %v1634 = vrot.slane %v1632, 1
    %v1636 = vmul.f32 %v1630, %v1634
    %v1637 = vmul.f32 %v1622, %v1636
    %v1639 = vrot.slane %v1637, 7
    %v1641 = vsub.f32 %v1630, %v1639
    %v1642 = vsel %vm358, %v1636, %v1641
    %v1644 = vsel %vm467, %v1642, 0
    %1646 = vmatprep.subr.mxu0 0.0
    %1647 = vmatpush1.msra.mxu0 %v466
    %1648 = vmatprep.subr.mxu0 0.0
    %1649 = vmatpush1.msra.mxu0 0.0
    %1650 = vmatprep.subr.mxu0 0.0
    %1651 = vmatpush1.msra.mxu0 0.0
    %1652 = vmatprep.subr.mxu0 0.0
    %1653 = vmatpush1.msra.mxu0 0.0
    %1654 = vmatprep.subr.mxu0 0.0
    %1655 = vmatpush1.msra.mxu0 0.0
    %1656 = vmatprep.subr.mxu0 0.0
    %1657 = vmatpush1.msra.mxu0 0.0
    %1658 = vmatprep.subr.mxu0 0.0
    %1659 = vmatpush1.msra.mxu0 0.0
    %1660 = vmatprep.subr.mxu0 0.0
    %1661 = vmatpush1.msra.mxu0 0.0
    %1662 = vmatprep.subr.mxu0 0.0
    %1663 = vmatpush1.msra.mxu0 0.0
    %1664 = vmatprep.subr.mxu0 0.0
    %1665 = vmatpush1.msra.mxu0 0.0
    %1666 = vmatprep.subr.mxu0 0.0
    %1667 = vmatpush1.msra.mxu0 0.0
    %1668 = vmatprep.subr.mxu0 0.0
    %1669 = vmatpush1.msra.mxu0 0.0
    %1670 = vmatprep.subr.mxu0 0.0
    %1671 = vmatpush1.msra.mxu0 0.0
    %1672 = vmatprep.subr.mxu0 0.0
    %1673 = vmatpush1.msra.mxu0 0.0
    %1674 = vmatprep.subr.mxu0 0.0
    %1675 = vmatpush1.msra.mxu0 0.0
    %1676 = vmatprep.subr.mxu0 0.0
    %1677 = vmatpush1.msra.mxu0 0.0
    %1678 = vmatprep.subr.mxu0 0.0
    %1679 = vmatpush1.msra.mxu0 0.0
    %1680 = vmatprep.subr.mxu0 0.0
    %1681 = vmatpush1.msra.mxu0 0.0
    %1682 = vmatprep.subr.mxu0 0.0
    %1683 = vmatpush1.msra.mxu0 0.0
    %1684 = vmatprep.subr.mxu0 0.0
    %1685 = vmatpush1.msra.mxu0 0.0
    %1686 = vmatprep.subr.mxu0 0.0
    %1687 = vmatpush1.msra.mxu0 0.0
    %1688 = vmatprep.subr.mxu0 0.0
    %1689 = vmatpush1.msra.mxu0 0.0
    %1690 = vmatprep.subr.mxu0 0.0
    %1691 = vmatpush1.msra.mxu0 0.0
    %1692 = vmatprep.subr.mxu0 0.0
    %1693 = vmatpush1.msra.mxu0 0.0
    %1694 = vmatprep.subr.mxu0 0.0
    %1695 = vmatpush1.msra.mxu0 0.0
    %1696 = vmatprep.subr.mxu0 0.0
    %1697 = vmatpush1.msra.mxu0 0.0
    %1698 = vmatprep.subr.mxu0 0.0
    %1699 = vmatpush1.msra.mxu0 0.0
    %1700 = vmatprep.subr.mxu0 0.0
    %1701 = vmatpush1.msra.mxu0 0.0
    %1702 = vmatprep.subr.mxu0 0.0
    %1703 = vmatpush1.msra.mxu0 0.0
    %1704 = vmatprep.subr.mxu0 0.0
    %1705 = vmatpush1.msra.mxu0 0.0
    %1706 = vmatprep.subr.mxu0 0.0
    %1707 = vmatpush1.msra.mxu0 0.0
    %1708 = vmatprep.subr.mxu0 0.0
    %1709 = vmatpush1.msra.mxu0 0.0
    %1710 = vmatprep.mubr.f32.mxu0 0.0
    %1711 = vmatmul.mubr.f32.gmra.mrb[0].mxu0 %v1644
    %v1712 = vpop.f32.mrb[0].mxu0
    %v1713 = vadd.f32 0.0, %v1712
    %v1714 = vpop.f32.mrb[0].mxu0
    %1715 = vdwg.mxu0
    %v1716 = vlaneseq
    %v1717 = vshrl.u32 %v1716, 7
    %v1718 = vsub.s32 0, %v1717
    %v1719 = vrot.slane %v1713, %v1718
    %v1720 = vmul.f32 %v1524, %v1719
    %v1721 = vlaneseq
    %v1722 = vshrl.u32 %v1721, 7
    %v1723 = vsub.s32 1, %v1722
    %v1724 = vrot.slane %v1713, %v1723
    %v1725 = vadd.f32 %v1720, %v1724
    %v1726 = vmax.f32 %v1725, 0.0
    %1728 = vrot.lane.b32.xlu0 %v1726, 120
    %v1729 = vpop.permute.xlu0 %1728
    %1731 = vrot.lane.b32.xlu0 %v1726, 24
    %v1732 = vpop.permute.xlu0 %1731
    %vm1734 = vcmask 195584
    %v1735 = vsel %vm1734, %v1729, %v1732
    %v1736 = vmax.f32 %v1726, %v1735
    %v1738 = vrot.slane %v1736, 1
    %v1740 = vsel %vm585, %v1738, %v1738
    %v1741 = vmax.f32 %v1736, %v1740
    %v1742 = vsel %vm467, %v611, 0
    %1744 = vmatprep.subr.mxu0 0.0
    %1745 = vmatpush1.msra.mxu0 %v1741
    %1746 = vmatprep.subr.mxu0 0.0
    %1747 = vmatpush1.msra.mxu0 0.0
    %1748 = vmatprep.subr.mxu0 0.0
    %1749 = vmatpush1.msra.mxu0 0.0
    %1750 = vmatprep.subr.mxu0 0.0
    %1751 = vmatpush1.msra.mxu0 0.0
    %1752 = vmatprep.subr.mxu0 0.0
    %1753 = vmatpush1.msra.mxu0 0.0
    %1754 = vmatprep.subr.mxu0 0.0
    %1755 = vmatpush1.msra.mxu0 0.0
    %1756 = vmatprep.subr.mxu0 0.0
    %1757 = vmatpush1.msra.mxu0 0.0
    %1758 = vmatprep.subr.mxu0 0.0
    %1759 = vmatpush1.msra.mxu0 0.0
    %1760 = vmatprep.subr.mxu0 0.0
    %1761 = vmatpush1.msra.mxu0 0.0
    %1762 = vmatprep.subr.mxu0 0.0
    %1763 = vmatpush1.msra.mxu0 0.0
    %1764 = vmatprep.subr.mxu0 0.0
    %1765 = vmatpush1.msra.mxu0 0.0
    %1766 = vmatprep.subr.mxu0 0.0
    %1767 = vmatpush1.msra.mxu0 0.0
    %1768 = vmatprep.subr.mxu0 0.0
    %1769 = vmatpush1.msra.mxu0 0.0
    %1770 = vmatprep.subr.mxu0 0.0
    %1771 = vmatpush1.msra.mxu0 0.0
    %1772 = vmatprep.subr.mxu0 0.0
    %1773 = vmatpush1.msra.mxu0 0.0
    %1774 = vmatprep.subr.mxu0 0.0
    %1775 = vmatpush1.msra.mxu0 0.0
    %1776 = vmatprep.subr.mxu0 0.0
    %1777 = vmatpush1.msra.mxu0 0.0
    %1778 = vmatprep.subr.mxu0 0.0
    %1779 = vmatpush1.msra.mxu0 0.0
    %1780 = vmatprep.subr.mxu0 0.0
    %1781 = vmatpush1.msra.mxu0 0.0
    %1782 = vmatprep.subr.mxu0 0.0
    %1783 = vmatpush1.msra.mxu0 0.0
    %1784 = vmatprep.subr.mxu0 0.0
    %1785 = vmatpush1.msra.mxu0 0.0
    %1786 = vmatprep.subr.mxu0 0.0
    %1787 = vmatpush1.msra.mxu0 0.0
    %1788 = vmatprep.subr.mxu0 0.0
    %1789 = vmatpush1.msra.mxu0 0.0
    %1790 = vmatprep.subr.mxu0 0.0
    %1791 = vmatpush1.msra.mxu0 0.0
    %1792 = vmatprep.subr.mxu0 0.0
    %1793 = vmatpush1.msra.mxu0 0.0
    %1794 = vmatprep.subr.mxu0 0.0
    %1795 = vmatpush1.msra.mxu0 0.0
    %1796 = vmatprep.subr.mxu0 0.0
    %1797 = vmatpush1.msra.mxu0 0.0
    %1798 = vmatprep.subr.mxu0 0.0
    %1799 = vmatpush1.msra.mxu0 0.0
    %1800 = vmatprep.subr.mxu0 0.0
    %1801 = vmatpush1.msra.mxu0 0.0
    %1802 = vmatprep.subr.mxu0 0.0
    %1803 = vmatpush1.msra.mxu0 0.0
    %1804 = vmatprep.subr.mxu0 0.0
    %1805 = vmatpush1.msra.mxu0 0.0
    %1806 = vmatprep.subr.mxu0 0.0
    %1807 = vmatpush1.msra.mxu0 0.0
    %1808 = vmatprep.mubr.f32.mxu0 0.0
    %1809 = vmatmul.mubr.f32.gmra.mrb[0].mxu0 %v1742
    %v1810 = vpop.f32.mrb[0].mxu0
    %v1811 = vadd.f32 0.0, %v1810
    %v1812 = vpop.f32.mrb[0].mxu0
    %1813 = vdwg.mxu0
    %v1814 = vpack.c.bf16 %v1811, %v1811
    %vm1815 = vcmp.lt.s32.totalorder %v40, 0
    %v1816 = vsub.s32 0, %v40
    %v1817 = vsel %vm1815, %v1816, %v40
    %v1818 = vshrl.u32 %v1817, 1
    %v1819 = vand.u32 %v1817, 1
    %v1820 = vsub.s32 0, %v1819
    %v1821 = vsel %vm1815, %v1820, %v1819
    %vm1822 = vcmp.ne.s32.totalorder %v1821, 0
    %vm1823 = vcmp.lt.s32.totalorder %v1821, 0
    %vm1824 = vmand %vm1823, %vm1822
    %v1825 = vadd.s32 %v1821, 2
    %v1826 = vsel %vm1824, %v1825, %v1821
    %vm1827 = vcmp.eq.s32.totalorder %v1826, 0
    %v1829 = vshrl.u32 %v1814, 16
    %v1831 = vrot.slane %v1829, 1
    %v1833 = vrot.slane %v1829, 7
    %v1834 = vshll.u32 %v1814, 16
    %v1836 = vor.u32 %v1833, %v1834
    %v1838 = vsel %vm116, %v1831, %v1836
    %vm1839 = vmpackc.low %vm1827, %vm1827
    %v1840 = vsel %vm1839, 0, %v1838
    %vm1841 = vcmp.eq.s32.totalorder %v1826, 1
    %v1842 = vrot.slane %v1834, 1
    %v1843 = vor.u32 %v1829, %v1842
    %v1845 = vrot.slane %v1834, 7
    %vm1847 = vcmask 1041408
    %vm1848 = vsmask.f32 1280
    %vm1849 = vmand %vm1847, %vm1848
    %v1850 = vsel %vm1849, %v1843, %v1845
    %vm1851 = vmpackc.low %vm1841, %vm1841
    %v1852 = vsel %vm1851, 0, %v1850
    %1854 = vrot.lane.b32.xlu0 %v1814, 32
    %v1855 = vpop.permute.xlu0 %1854
    %1857 = vrot.lane.b32.xlu0 %v1852, 64
    %v1858 = vpop.permute.xlu0 %1857
    %v1861 = vsel %vm613, %v1840, %v1855
    %v1863 = vsel %vm176, %v1861, %v1858
    %v1864 = vld [vmem:[%s4] sm:$0xf]
    %v1865 = vld [vmem:[%s4 + $0x4] sm:$0xf]
    %v1866 = vld [vmem:[%s4 + $0x8] sm:$0xf]
    %v1867 = vld [vmem:[%s4 + $0xc] sm:$0xf]
    %v1868 = vld [vmem:[%s4 + $0x10] sm:$0xf]
    %v1869 = vld [vmem:[%s4 + $0x14] sm:$0xf]
    %v1870 = vld [vmem:[%s4 + $0x18] sm:$0xf]
    %v1871 = vld [vmem:[%s4 + $0x1c] sm:$0xf]
    %v1872 = vld [vmem:[%s4 + $0x20] sm:$0xf]
    %v1873 = vld [vmem:[%s4 + $0x24] sm:$0xf]
    %v1874 = vld [vmem:[%s4 + $0x28] sm:$0xf]
    %v1875 = vld [vmem:[%s4 + $0x2c] sm:$0xf]
    %v1888 = vunpack.c.l.b16 %v1864
    %v1889 = vunpack.c.l.b16 %v1865
    %v1890 = vunpack.c.l.b16 %v1866
    %v1891 = vunpack.c.l.b16 %v1867
    %v1892 = vunpack.c.l.b16 %v1868
    %v1893 = vunpack.c.l.b16 %v1869
    %v1894 = vunpack.c.l.b16 %v1870
    %v1895 = vunpack.c.l.b16 %v1871
    %v1896 = vunpack.c.l.b16 %v1872
    %v1897 = vunpack.c.l.b16 %v1873
    %v1898 = vunpack.c.l.b16 %v1874
    %v1899 = vunpack.c.l.b16 %v1875
    %v1900 = vpack.c.b16 %v1889, %v1888
    %v1901 = vpack.c.b16 %v1891, %v1890
    %v1902 = vpack.c.b16 %v1893, %v1892
    %v1903 = vpack.c.b16 %v1895, %v1894
    %v1904 = vpack.c.b16 %v1897, %v1896
    %v1905 = vpack.c.b16 %v1899, %v1898
    %vm1912 = vcmask 785408
    %v1913 = vsel %vm1912, %v1863, 0
    %1915 = vmatprep.subr.bf16.mxu0 0
    %1916 = vmatpush1.bf16.msra.mxu0 %v1900
    %1917 = vmatprep.subr.bf16.mxu0 0
    %1918 = vmatpush1.bf16.msra.mxu0 %v1901
    %1919 = vmatprep.subr.bf16.mxu0 0
    %1920 = vmatpush1.bf16.msra.mxu0 %v1902
    %1921 = vmatprep.subr.bf16.mxu0 0
    %1922 = vmatpush1.bf16.msra.mxu0 %v1903
    %1923 = vmatprep.subr.bf16.mxu0 0
    %1924 = vmatpush1.bf16.msra.mxu0 %v1904
    %1925 = vmatprep.subr.bf16.mxu0 0
    %1926 = vmatpush1.bf16.msra.mxu0 %v1905
    %1927 = vmatprep.subr.bf16.mxu0 0
    %1928 = vmatpush1.bf16.msra.mxu0 0
    %1929 = vmatprep.subr.bf16.mxu0 0
    %1930 = vmatpush1.bf16.msra.mxu0 0
    %1931 = vmatprep.subr.bf16.mxu0 0
    %1932 = vmatpush1.bf16.msra.mxu0 0
    %1933 = vmatprep.subr.bf16.mxu0 0
    %1934 = vmatpush1.bf16.msra.mxu0 0
    %1935 = vmatprep.subr.bf16.mxu0 0
    %1936 = vmatpush1.bf16.msra.mxu0 0
    %1937 = vmatprep.subr.bf16.mxu0 0
    %1938 = vmatpush1.bf16.msra.mxu0 0
    %1939 = vmatprep.subr.bf16.mxu0 0
    %1940 = vmatpush1.bf16.msra.mxu0 0
    %1941 = vmatprep.subr.bf16.mxu0 0
    %1942 = vmatpush1.bf16.msra.mxu0 0
    %1943 = vmatprep.subr.bf16.mxu0 0
    %1944 = vmatpush1.bf16.msra.mxu0 0
    %1945 = vmatprep.subr.bf16.mxu0 0
    %1946 = vmatpush1.bf16.msra.mxu0 0
    %1947 = vmatprep.mubr.bf16.mxu0 0
    %1948 = vmatmul.mubr.bf16.gmra.mrb[0].mxu0 %v1913
    %v1949 = vpop.f32.mrb[0].mxu0
    %v1950 = vadd.f32 0.0, %v1949
    %v1951 = vpop.f32.mrb[0].mxu0
    %v1952 = vpop.f32.mrb[0].mxu0
    %v1953 = vpop.f32.mrb[0].mxu0
    %1954 = vdwg.mxu0
    %vm1955 = vcmask 125952
    %v1956 = vsel %vm1955, %v1950, 0.0
    %v1957 = vrot.slane %v1956, 4
    %v1958 = vadd.f32 %v1956, %v1957
    %v1959 = vrot.slane %v1958, 2
    %v1960 = vadd.f32 %v1958, %v1959
    %v1961 = vrot.slane %v1960, 1
    %v1962 = vadd.f32 %v1960, %v1961
    %v1963 = vmul.f32 %v1950, %v1950
    %v1964 = vsel %vm1955, %v1963, 0.0
    %v1965 = vrot.slane %v1964, 4
    %v1966 = vadd.f32 %v1964, %v1965
    %v1967 = vrot.slane %v1966, 2
    %v1968 = vadd.f32 %v1966, %v1967
    %v1969 = vrot.slane %v1968, 1
    %v1970 = vadd.f32 %v1968, %v1969
    %v1971 = vsel %vm358, %v1962, %v1970
    %v1972 = vld [vmem:[%s6] sm:$0xff]
    %v1973 = vld [vmem:[%s6 + $0x8] sm:$0xff]
    %v1975 = vsel %vm1271, %v1971, 0
    %1977 = vmatprep.subr.mxu0 0.0
    %1978 = vmatpush1.msra.mxu0 %v1972
    %1979 = vmatprep.subr.mxu0 0.0
    %1980 = vmatpush1.msra.mxu0 %v1973
    %1981 = vmatprep.subr.mxu0 0.0
    %1982 = vmatpush1.msra.mxu0 0.0
    %1983 = vmatprep.subr.mxu0 0.0
    %1984 = vmatpush1.msra.mxu0 0.0
    %1985 = vmatprep.subr.mxu0 0.0
    %1986 = vmatpush1.msra.mxu0 0.0
    %1987 = vmatprep.subr.mxu0 0.0
    %1988 = vmatpush1.msra.mxu0 0.0
    %1989 = vmatprep.subr.mxu0 0.0
    %1990 = vmatpush1.msra.mxu0 0.0
    %1991 = vmatprep.subr.mxu0 0.0
    %1992 = vmatpush1.msra.mxu0 0.0
    %1993 = vmatprep.subr.mxu0 0.0
    %1994 = vmatpush1.msra.mxu0 0.0
    %1995 = vmatprep.subr.mxu0 0.0
    %1996 = vmatpush1.msra.mxu0 0.0
    %1997 = vmatprep.subr.mxu0 0.0
    %1998 = vmatpush1.msra.mxu0 0.0
    %1999 = vmatprep.subr.mxu0 0.0
    %2000 = vmatpush1.msra.mxu0 0.0
    %2001 = vmatprep.subr.mxu0 0.0
    %2002 = vmatpush1.msra.mxu0 0.0
    %2003 = vmatprep.subr.mxu0 0.0
    %2004 = vmatpush1.msra.mxu0 0.0
    %2005 = vmatprep.subr.mxu0 0.0
    %2006 = vmatpush1.msra.mxu0 0.0
    %2007 = vmatprep.subr.mxu0 0.0
    %2008 = vmatpush1.msra.mxu0 0.0
    %2009 = vmatprep.subr.mxu0 0.0
    %2010 = vmatpush1.msra.mxu0 0.0
    %2011 = vmatprep.subr.mxu0 0.0
    %2012 = vmatpush1.msra.mxu0 0.0
    %2013 = vmatprep.subr.mxu0 0.0
    %2014 = vmatpush1.msra.mxu0 0.0
    %2015 = vmatprep.subr.mxu0 0.0
    %2016 = vmatpush1.msra.mxu0 0.0
    %2017 = vmatprep.subr.mxu0 0.0
    %2018 = vmatpush1.msra.mxu0 0.0
    %2019 = vmatprep.subr.mxu0 0.0
    %2020 = vmatpush1.msra.mxu0 0.0
    %2021 = vmatprep.subr.mxu0 0.0
    %2022 = vmatpush1.msra.mxu0 0.0
    %2023 = vmatprep.subr.mxu0 0.0
    %2024 = vmatpush1.msra.mxu0 0.0
    %2025 = vmatprep.subr.mxu0 0.0
    %2026 = vmatpush1.msra.mxu0 0.0
    %2027 = vmatprep.subr.mxu0 0.0
    %2028 = vmatpush1.msra.mxu0 0.0
    %2029 = vmatprep.subr.mxu0 0.0
    %2030 = vmatpush1.msra.mxu0 0.0
    %2031 = vmatprep.subr.mxu0 0.0
    %2032 = vmatpush1.msra.mxu0 0.0
    %2033 = vmatprep.subr.mxu0 0.0
    %2034 = vmatpush1.msra.mxu0 0.0
    %2035 = vmatprep.subr.mxu0 0.0
    %2036 = vmatpush1.msra.mxu0 0.0
    %2037 = vmatprep.subr.mxu0 0.0
    %2038 = vmatpush1.msra.mxu0 0.0
    %2039 = vmatprep.subr.mxu0 0.0
    %2040 = vmatpush1.msra.mxu0 0.0
    %2041 = vmatprep.mubr.f32.mxu0 0.0
    %2042 = vmatmul.mubr.f32.gmra.mrb[0].mxu0 %v1975
    %v2043 = vpop.f32.mrb[0].mxu0
    %v2044 = vadd.f32 0.0, %v2043
    %v2045 = vpop.f32.mrb[0].mxu0
    %2046 = vdwg.mxu0
    %v2047 = vmul.f32 %v2044, 0.125
    %v2048 = vmul.f32 %v2047, %v2047
    %v2050 = vrot.slane %v2048, 7
    %v2052 = vsub.f32 %v2047, %v2050
    %v2053 = vmax.f32 %v2052, 0.0
    %s2054 = scalar_lea.vmem %s5, 6
    %v2055 = vld [vmem:[%s2054] sm:$0x3]
    %v2056 = vadd.f32 %v2053, 1e-05
    %v2057 = vrsqrt.pop %v2056
    %v2059 = vrot.slane %v2057, 1
    %v2061 = vmul.f32 %v2055, %v2059
    %v2062 = vmul.f32 %v2047, %v2061
    %v2064 = vrot.slane %v2062, 7
    %v2066 = vsub.f32 %v2055, %v2064
    %v2067 = vsel %vm358, %v2061, %v2066
    %v2069 = vsel %vm467, %v2067, 0
    %2071 = vmatprep.subr.mxu0 0.0
    %2072 = vmatpush1.msra.mxu0 %v466
    %2073 = vmatprep.subr.mxu0 0.0
    %2074 = vmatpush1.msra.mxu0 0.0
    %2075 = vmatprep.subr.mxu0 0.0
    %2076 = vmatpush1.msra.mxu0 0.0
    %2077 = vmatprep.subr.mxu0 0.0
    %2078 = vmatpush1.msra.mxu0 0.0
    %2079 = vmatprep.subr.mxu0 0.0
    %2080 = vmatpush1.msra.mxu0 0.0
    %2081 = vmatprep.subr.mxu0 0.0
    %2082 = vmatpush1.msra.mxu0 0.0
    %2083 = vmatprep.subr.mxu0 0.0
    %2084 = vmatpush1.msra.mxu0 0.0
    %2085 = vmatprep.subr.mxu0 0.0
    %2086 = vmatpush1.msra.mxu0 0.0
    %2087 = vmatprep.subr.mxu0 0.0
    %2088 = vmatpush1.msra.mxu0 0.0
    %2089 = vmatprep.subr.mxu0 0.0
    %2090 = vmatpush1.msra.mxu0 0.0
    %2091 = vmatprep.subr.mxu0 0.0
    %2092 = vmatpush1.msra.mxu0 0.0
    %2093 = vmatprep.subr.mxu0 0.0
    %2094 = vmatpush1.msra.mxu0 0.0
    %2095 = vmatprep.subr.mxu0 0.0
    %2096 = vmatpush1.msra.mxu0 0.0
    %2097 = vmatprep.subr.mxu0 0.0
    %2098 = vmatpush1.msra.mxu0 0.0
    %2099 = vmatprep.subr.mxu0 0.0
    %2100 = vmatpush1.msra.mxu0 0.0
    %2101 = vmatprep.subr.mxu0 0.0
    %2102 = vmatpush1.msra.mxu0 0.0
    %2103 = vmatprep.subr.mxu0 0.0
    %2104 = vmatpush1.msra.mxu0 0.0
    %2105 = vmatprep.subr.mxu0 0.0
    %2106 = vmatpush1.msra.mxu0 0.0
    %2107 = vmatprep.subr.mxu0 0.0
    %2108 = vmatpush1.msra.mxu0 0.0
    %2109 = vmatprep.subr.mxu0 0.0
    %2110 = vmatpush1.msra.mxu0 0.0
    %2111 = vmatprep.subr.mxu0 0.0
    %2112 = vmatpush1.msra.mxu0 0.0
    %2113 = vmatprep.subr.mxu0 0.0
    %2114 = vmatpush1.msra.mxu0 0.0
    %2115 = vmatprep.subr.mxu0 0.0
    %2116 = vmatpush1.msra.mxu0 0.0
    %2117 = vmatprep.subr.mxu0 0.0
    %2118 = vmatpush1.msra.mxu0 0.0
    %2119 = vmatprep.subr.mxu0 0.0
    %2120 = vmatpush1.msra.mxu0 0.0
    %2121 = vmatprep.subr.mxu0 0.0
    %2122 = vmatpush1.msra.mxu0 0.0
    %2123 = vmatprep.subr.mxu0 0.0
    %2124 = vmatpush1.msra.mxu0 0.0
    %2125 = vmatprep.subr.mxu0 0.0
    %2126 = vmatpush1.msra.mxu0 0.0
    %2127 = vmatprep.subr.mxu0 0.0
    %2128 = vmatpush1.msra.mxu0 0.0
    %2129 = vmatprep.subr.mxu0 0.0
    %2130 = vmatpush1.msra.mxu0 0.0
    %2131 = vmatprep.subr.mxu0 0.0
    %2132 = vmatpush1.msra.mxu0 0.0
    %2133 = vmatprep.subr.mxu0 0.0
    %2134 = vmatpush1.msra.mxu0 0.0
    %2135 = vmatprep.mubr.f32.mxu0 0.0
    %2136 = vmatmul.mubr.f32.gmra.mrb[0].mxu0 %v2069
    %v2137 = vpop.f32.mrb[0].mxu0
    %v2138 = vadd.f32 0.0, %v2137
    %v2139 = vpop.f32.mrb[0].mxu0
    %2140 = vdwg.mxu0
    %v2141 = vlaneseq
    %v2142 = vshrl.u32 %v2141, 7
    %v2143 = vsub.s32 0, %v2142
    %v2144 = vrot.slane %v2138, %v2143
    %v2145 = vmul.f32 %v1950, %v2144
    %v2146 = vlaneseq
    %v2147 = vshrl.u32 %v2146, 7
    %v2148 = vsub.s32 1, %v2147
    %v2149 = vrot.slane %v2138, %v2148
    %v2150 = vadd.f32 %v2145, %v2149
    %v2151 = vmax.f32 %v2150, 0.0
    %2153 = vrot.lane.b32.xlu0 %v2151, 120
    %v2154 = vpop.permute.xlu0 %2153
    %2156 = vrot.lane.b32.xlu0 %v2151, 8
    %v2157 = vpop.permute.xlu0 %2156
    %v2159 = vsel %vm467, %v2154, %v2157
    %v2160 = vmax.f32 %v2151, %v2159
    %v2162 = vrot.slane %v2160, 1
    %v2164 = vrot.slane %v2160, 5
    %vm2166 = vcmask 1042432
    %v2167 = vsel %vm2166, %v2162, %v2164
    %v2168 = vmax.f32 %v2160, %v2167
    %vm2169 = vcmask 31744
    %v2170 = vsel %vm2169, %v611, 0
    %vm2172 = vcmask 1043456
    %v2174 = vsel %vm2172, %v2168, 0
    %2176 = vmatprep.subr.mxu0 0.0
    %2177 = vmatpush1.msra.mxu0 %v2174
    %2178 = vmatprep.subr.mxu0 0.0
    %2179 = vmatpush1.msra.mxu0 0.0
    %2180 = vmatprep.subr.mxu0 0.0
    %2181 = vmatpush1.msra.mxu0 0.0
    %2182 = vmatprep.subr.mxu0 0.0
    %2183 = vmatpush1.msra.mxu0 0.0
    %2184 = vmatprep.subr.mxu0 0.0
    %2185 = vmatpush1.msra.mxu0 0.0
    %2186 = vmatprep.subr.mxu0 0.0
    %2187 = vmatpush1.msra.mxu0 0.0
    %2188 = vmatprep.subr.mxu0 0.0
    %2189 = vmatpush1.msra.mxu0 0.0
    %2190 = vmatprep.subr.mxu0 0.0
    %2191 = vmatpush1.msra.mxu0 0.0
    %2192 = vmatprep.subr.mxu0 0.0
    %2193 = vmatpush1.msra.mxu0 0.0
    %2194 = vmatprep.subr.mxu0 0.0
    %2195 = vmatpush1.msra.mxu0 0.0
    %2196 = vmatprep.subr.mxu0 0.0
    %2197 = vmatpush1.msra.mxu0 0.0
    %2198 = vmatprep.subr.mxu0 0.0
    %2199 = vmatpush1.msra.mxu0 0.0
    %2200 = vmatprep.subr.mxu0 0.0
    %2201 = vmatpush1.msra.mxu0 0.0
    %2202 = vmatprep.subr.mxu0 0.0
    %2203 = vmatpush1.msra.mxu0 0.0
    %2204 = vmatprep.subr.mxu0 0.0
    %2205 = vmatpush1.msra.mxu0 0.0
    %2206 = vmatprep.subr.mxu0 0.0
    %2207 = vmatpush1.msra.mxu0 0.0
    %2208 = vmatprep.subr.mxu0 0.0
    %2209 = vmatpush1.msra.mxu0 0.0
    %2210 = vmatprep.subr.mxu0 0.0
    %2211 = vmatpush1.msra.mxu0 0.0
    %2212 = vmatprep.subr.mxu0 0.0
    %2213 = vmatpush1.msra.mxu0 0.0
    %2214 = vmatprep.subr.mxu0 0.0
    %2215 = vmatpush1.msra.mxu0 0.0
    %2216 = vmatprep.subr.mxu0 0.0
    %2217 = vmatpush1.msra.mxu0 0.0
    %2218 = vmatprep.subr.mxu0 0.0
    %2219 = vmatpush1.msra.mxu0 0.0
    %2220 = vmatprep.subr.mxu0 0.0
    %2221 = vmatpush1.msra.mxu0 0.0
    %2222 = vmatprep.subr.mxu0 0.0
    %2223 = vmatpush1.msra.mxu0 0.0
    %2224 = vmatprep.subr.mxu0 0.0
    %2225 = vmatpush1.msra.mxu0 0.0
    %2226 = vmatprep.subr.mxu0 0.0
    %2227 = vmatpush1.msra.mxu0 0.0
    %2228 = vmatprep.subr.mxu0 0.0
    %2229 = vmatpush1.msra.mxu0 0.0
    %2230 = vmatprep.subr.mxu0 0.0
    %2231 = vmatpush1.msra.mxu0 0.0
    %2232 = vmatprep.subr.mxu0 0.0
    %2233 = vmatpush1.msra.mxu0 0.0
    %2234 = vmatprep.subr.mxu0 0.0
    %2235 = vmatpush1.msra.mxu0 0.0
    %2236 = vmatprep.subr.mxu0 0.0
    %2237 = vmatpush1.msra.mxu0 0.0
    %2238 = vmatprep.subr.mxu0 0.0
    %2239 = vmatpush1.msra.mxu0 0.0
    %2240 = vmatprep.mubr.f32.mxu0 0.0
    %2241 = vmatmul.mubr.f32.gmra.mrb[0].mxu0 %v2170
    %v2242 = vpop.f32.mrb[0].mxu0
    %v2243 = vadd.f32 0.0, %v2242
    %v2244 = vpop.f32.mrb[0].mxu0
    %2245 = vdwg.mxu0
    %vm2246 = vcmask 58368
    %2247 = vst.msk [vmem:[#allocation2] sm:$0x3] %vm2246, %v2243
    // Predicated region
    $region34: #{tpu_custom_call.1} parent=1 // pred_check
      _
    $region35: #{tpu_custom_call.1} parent=1 // pred_check_branch
      %2249 = sbr.rel (0) target = $region37
    $region36: #{tpu_custom_call.1} parent=1 // pred_region
      %s2251 = ssub.s32 32, 32
      %2252 = vsyncadd [#allocation3], %s2251
      %s2254 = sshll.u32 [#allocation2], 4
      %s2255 = int_to_ptr.vmem [resolvable:$true] %s2254
      %2257 = dma.vmem_to_hbm [thread:$0]  %s2255, 32, %s8, [#allocation3]
    $region37: #{tpu_custom_call.1} parent=1 // pred_fallthru
      _
    // Predicated region
    $region38: #{tpu_custom_call.1} parent=1 // pred_check
      _
    $region39: #{tpu_custom_call.1} parent=1 // pred_check_branch
      %2259 = sbr.rel (0) target = $region41
    $region40: #{tpu_custom_call.1} parent=1 // pred_region
      %2260 = dma.done [#allocation3], 32
    $region41: #{tpu_custom_call.1} parent=1 // pred_fallthru
      _
    %2261 = vsyncpa [#allocation3], 1

</llo_original>
